<compile_context>
chip_gen: v7x
topology: tpu7x:2x2x1
jax: 0.10.0
libtpu: 0.0.40
codegen_flags: <defaults>
</compile_context>

<pallas_src>
import math
from functools import partial

import jax
import jax.numpy as jnp
from jax import lax
from jax.experimental import pallas as pl
from jax.experimental.pallas import tpu as pltpu


def _round_up(x: int, m: int) -> int:
    return ((x + m - 1) // m) * m


def _cross_attention_kernel(q_in_ref, ctx_ref,
                            wq_ref, bq_ref,
                            wk_ref, bk_ref,
                            wv_ref, bv_ref,
                            wo_ref, bo_ref,
                            out_ref,
                            *, num_heads: int, head_size: int,
                            s_kv: int, s_kv_pad: int):
    x = q_in_ref[0]            # (TQ, D_q)       native dtype (no f32 upcast)
    c = ctx_ref[0]             # (S_kv_pad, D_ctx)
    cdt = x.dtype              # MXU operand dtype

    # Projections: MXU consumes native-dtype operands, accumulates in f32.
    # (softmax scale is already folded into wq/bq by the wrapper)
    q = (jnp.dot(x, wq_ref[...], preferred_element_type=jnp.float32)
         + bq_ref[...]).astype(cdt)
    k = (jnp.dot(c, wk_ref[...], preferred_element_type=jnp.float32)
         + bk_ref[...]).astype(cdt)
    v = (jnp.dot(c, wv_ref[...], preferred_element_type=jnp.float32)
         + bv_ref[...]).astype(cdt)

    # Additive mask for padded key columns (hoisted out of the head loop).
    if s_kv_pad > s_kv:
        col = lax.broadcasted_iota(jnp.int32, (1, s_kv_pad), 1)
        kv_mask = jnp.where(col < s_kv, 0.0, -1e30).astype(jnp.float32)
    else:
        kv_mask = None

    acc = jnp.zeros(out_ref.shape[1:], jnp.float32)    # (TQ, D_q)

    for h in range(num_heads):                          # static head loop
        lo = h * head_size
        hi = lo + head_size
        qh = q[:, lo:hi]                                # (TQ, hs)
        kh = k[:, lo:hi]                                # (S_kv_pad, hs)
        vh = v[:, lo:hi]                                # (S_kv_pad, hs)

        # scores: contract last dims directly (no kh.T relayout)
        s = lax.dot_general(qh, kh, (((1,), (1,)), ((), ())),
                            preferred_element_type=jnp.float32)
        if kv_mask is not None:
            s = s + kv_mask                             # mask padded keys
        s = s - jnp.max(s, axis=-1, keepdims=True)
        p = jnp.exp(s)                                  # f32 softmax math
        inv = pl.reciprocal(jnp.sum(p, axis=-1, keepdims=True), approx=True)

        # Unnormalized p @ v, then normalize the narrow (TQ, hs) result.
        o_h = jnp.dot(p.astype(cdt), vh, preferred_element_type=jnp.float32)
        o_h = o_h * inv

        # Per-head output projection, accumulated lane-dense (N = D_q).
        acc = acc + jnp.dot(o_h.astype(cdt), wo_ref[lo:hi, :],
                            preferred_element_type=jnp.float32)

    out_ref[0] = (acc + bo_ref[...]).astype(out_ref.dtype)


def cross_attention_pallas(query, context, params, *, num_heads: int,
                           tq: int = 256):
    """query: (B, S_q, D_q), context: (B, S_kv, D_ctx) -> (B, S_q, D_q)."""
    B, S_q, D_q = query.shape
    _, S_kv, D_ctx = context.shape
    head_size = D_q // num_heads
    scale = 1.0 / math.sqrt(head_size)

    # --- padding / tiling -------------------------------------------------
    if S_q <= tq:
        tq_eff = _round_up(S_q, 8)
        s_q_pad = tq_eff
    else:
        tq_eff = tq
        s_q_pad = _round_up(S_q, tq)
    s_kv_pad = _round_up(S_kv, 128)

    q_pad = query
    if s_q_pad != S_q:
        q_pad = jnp.pad(query, ((0, 0), (0, s_q_pad - S_q), (0, 0)))
    c_pad = context
    if s_kv_pad != S_kv:
        c_pad = jnp.pad(context, ((0, 0), (0, s_kv_pad - S_kv), (0, 0)))

    dt = query.dtype
    # Weights pre-transposed to (in, out); softmax scale folded into Wq/bq.
    wq_t = (params["wq"].T * scale).astype(dt)          # (D_q,  D_q)
    wk_t = params["wk"].T.astype(dt)                    # (D_ctx, D_q)
    wv_t = params["wv"].T.astype(dt)                    # (D_ctx, D_q)
    wo_t = params["wo"].T.astype(dt)                    # (D_q,  D_q)
    bq = (params["bq"] * scale).reshape(1, D_q).astype(jnp.float32)
    bk = params["bk"].reshape(1, D_q).astype(jnp.float32)
    bv = params["bv"].reshape(1, D_q).astype(jnp.float32)
    bo = params["bo"].reshape(1, D_q).astype(jnp.float32)

    num_q_tiles = s_q_pad // tq_eff

    def whole_spec(shape):
        return pl.BlockSpec(shape, lambda b, i: tuple(0 for _ in shape))

    kernel = partial(_cross_attention_kernel,
                     num_heads=num_heads, head_size=head_size,
                     s_kv=S_kv, s_kv_pad=s_kv_pad)

    out = pl.pallas_call(
        kernel,
        out_shape=jax.ShapeDtypeStruct((B, s_q_pad, D_q), query.dtype),
        grid_spec=pltpu.PrefetchScalarGridSpec(
            num_scalar_prefetch=0,
            grid=(B, num_q_tiles),
            in_specs=[
                pl.BlockSpec((1, tq_eff, D_q), lambda b, i: (b, i, 0)),     # q
                pl.BlockSpec((1, s_kv_pad, D_ctx), lambda b, i: (b, 0, 0)), # ctx
                whole_spec(wq_t.shape), whole_spec(bq.shape),
                whole_spec(wk_t.shape), whole_spec(bk.shape),
                whole_spec(wv_t.shape), whole_spec(bv.shape),
                whole_spec(wo_t.shape), whole_spec(bo.shape),
            ],
            out_specs=pl.BlockSpec((1, tq_eff, D_q), lambda b, i: (b, i, 0)),
        ),
        compiler_params=pltpu.CompilerParams(
            dimension_semantics=("parallel", "parallel"),
            vmem_limit_bytes=32 * 1024 * 1024),
    )(q_pad, c_pad, wq_t, bq, wk_t, bk, wv_t, bv, wo_t, bo)

    if s_q_pad != S_q:
        out = out[:, :S_q, :]
    return out


def cross_attention_ref(query, context, params, *, num_heads: int):
    """Pure-JAX reference matching the PyTorch forward exactly."""
    B, S_q, D_q = query.shape
    _, S_kv, _ = context.shape
    hs = D_q // num_heads
    scale = 1.0 / math.sqrt(hs)

    q = query @ params["wq"].T + params["bq"]
    k = context @ params["wk"].T + params["bk"]
    v = context @ params["wv"].T + params["bv"]

    q = q.reshape(B, S_q, num_heads, hs).transpose(0, 2, 1, 3)
    k = k.reshape(B, S_kv, num_heads, hs).transpose(0, 2, 1, 3)
    v = v.reshape(B, S_kv, num_heads, hs).transpose(0, 2, 1, 3)

    scores = jnp.einsum("bhqd,bhkd->bhqk", q, k) * scale
    attn = jax.nn.softmax(scores, axis=-1)
    out = jnp.einsum("bhqk,bhkd->bhqd", attn, v)
    out = out.transpose(0, 2, 1, 3).reshape(B, S_q, D_q)
    return out @ params["wo"].T + params["bo"]


if __name__ == "__main__":
    # Small shapes consistent with the module's forward.
    B, S_q, S_kv = 2, 16, 8
    num_heads, D_q, D_ctx = 4, 32, 64

    key = jax.random.PRNGKey(0)
    ks = jax.random.split(key, 10)

    # Deterministic synthetic parameters (nn.Linear weight layout = (out, in)).
    params = {
        "wq": jax.random.normal(ks[0], (D_q, D_q), jnp.float32) * 0.05,
        "bq": jax.random.normal(ks[1], (D_q,), jnp.float32) * 0.05,
        "wk": jax.random.normal(ks[2], (D_q, D_ctx), jnp.float32) * 0.05,
        "bk": jax.random.normal(ks[3], (D_q,), jnp.float32) * 0.05,
        "wv": jax.random.normal(ks[4], (D_q, D_ctx), jnp.float32) * 0.05,
        "bv": jax.random.normal(ks[5], (D_q,), jnp.float32) * 0.05,
        "wo": jax.random.normal(ks[6], (D_q, D_q), jnp.float32) * 0.05,
        "bo": jax.random.normal(ks[7], (D_q,), jnp.float32) * 0.05,
    }

    query = jax.random.normal(ks[8], (B, S_q, D_q), jnp.float32)
    context = jax.random.normal(ks[9], (B, S_kv, D_ctx), jnp.float32)

    out = cross_attention_pallas(query, context, params, num_heads=num_heads)
    out = jax.block_until_ready(out)

    ref = cross_attention_ref(query, context, params, num_heads=num_heads)
    assert out.shape == (B, S_q, D_q), out.shape
    # approx-reciprocal softmax normalization -> slightly looser tolerance
    assert jnp.allclose(out, ref, atol=5e-3, rtol=5e-3), \
        f"max abs err {jnp.max(jnp.abs(out - ref))}"

    print("KERNEL_OK")
</pallas_src>

<mosaic_0001>
module attributes {stable_mosaic.version = 11 : i64} {
  func.func @_cross_attention_kernel(%arg0: i32, %arg1: i32, %arg2: memref<1x16x32xf32, #tpu.memory_space<vmem>>, %arg3: memref<1x128x64xf32, #tpu.memory_space<vmem>>, %arg4: memref<32x32xf32, #tpu.memory_space<vmem>>, %arg5: memref<1x32xf32, #tpu.memory_space<vmem>>, %arg6: memref<64x32xf32, #tpu.memory_space<vmem>>, %arg7: memref<1x32xf32, #tpu.memory_space<vmem>>, %arg8: memref<64x32xf32, #tpu.memory_space<vmem>>, %arg9: memref<1x32xf32, #tpu.memory_space<vmem>>, %arg10: memref<32x32xf32, #tpu.memory_space<vmem>>, %arg11: memref<1x32xf32, #tpu.memory_space<vmem>>, %arg12: memref<1x16x32xf32, #tpu.memory_space<vmem>>) attributes {dimension_semantics = [#tpu.dimension_semantics<parallel>, #tpu.dimension_semantics<parallel>], iteration_bounds = array<i64: 2, 1>, scalar_prefetch = 0 : i64, scratch_operands = 0 : i64, tpu.core_type = #tpu.core_type<tc>, window_params = [{transform_indices = @transform_0, window_bounds = array<i64: 1, 16, 32>}, {transform_indices = @transform_1, window_bounds = array<i64: 1, 128, 64>}, {pipeline_mode = #tpu.pipeline_mode<synchronous>, transform_indices = @transform_2, window_bounds = array<i64: 32, 32>}, {pipeline_mode = #tpu.pipeline_mode<synchronous>, transform_indices = @transform_3, window_bounds = array<i64: 1, 32>}, {pipeline_mode = #tpu.pipeline_mode<synchronous>, transform_indices = @transform_4, window_bounds = array<i64: 64, 32>}, {pipeline_mode = #tpu.pipeline_mode<synchronous>, transform_indices = @transform_5, window_bounds = array<i64: 1, 32>}, {pipeline_mode = #tpu.pipeline_mode<synchronous>, transform_indices = @transform_6, window_bounds = array<i64: 64, 32>}, {pipeline_mode = #tpu.pipeline_mode<synchronous>, transform_indices = @transform_7, window_bounds = array<i64: 1, 32>}, {pipeline_mode = #tpu.pipeline_mode<synchronous>, transform_indices = @transform_8, window_bounds = array<i64: 32, 32>}, {pipeline_mode = #tpu.pipeline_mode<synchronous>, transform_indices = @transform_9, window_bounds = array<i64: 1, 32>}, {transform_indices = @transform_10, window_bounds = array<i64: 1, 16, 32>}]} {
    %c0 = arith.constant 0 : index
    %c0_0 = arith.constant 0 : index
    %c0_1 = arith.constant 0 : index
    %0 = vector.load %arg2[%c0, %c0_0, %c0_1] : memref<1x16x32xf32, #tpu.memory_space<vmem>>, vector<1x16x32xf32>
    %1 = vector.shape_cast %0 : vector<1x16x32xf32> to vector<16x32xf32>
    %c0_2 = arith.constant 0 : index
    %c0_3 = arith.constant 0 : index
    %c0_4 = arith.constant 0 : index
    %2 = vector.load %arg3[%c0_2, %c0_3, %c0_4] : memref<1x128x64xf32, #tpu.memory_space<vmem>>, vector<1x128x64xf32>
    %3 = vector.shape_cast %2 : vector<1x128x64xf32> to vector<128x64xf32>
    %c0_5 = arith.constant 0 : index
    %c0_6 = arith.constant 0 : index
    %4 = vector.load %arg4[%c0_5, %c0_6] : memref<32x32xf32, #tpu.memory_space<vmem>>, vector<32x32xf32>
    %cst = arith.constant dense<0.000000e+00> : vector<16x32xf32>
    %5 = tpu.matmul %1, %4, %cst {dimension_numbers = #tpu.dot_dimension_numbers<[1], [0], [0], [1], [0, 0, 1, 1], [], []>} : vector<16x32xf32>, vector<32x32xf32>, vector<16x32xf32> -> vector<16x32xf32>
    %c0_7 = arith.constant 0 : index
    %c0_8 = arith.constant 0 : index
    %6 = vector.load %arg5[%c0_7, %c0_8] : memref<1x32xf32, #tpu.memory_space<vmem>>, vector<1x32xf32>
    %7 = vector.broadcast %6 : vector<1x32xf32> to vector<16x32xf32>
    %8 = arith.addf %5, %7 : vector<16x32xf32>
    %c0_9 = arith.constant 0 : index
    %c0_10 = arith.constant 0 : index
    %9 = vector.load %arg6[%c0_9, %c0_10] : memref<64x32xf32, #tpu.memory_space<vmem>>, vector<64x32xf32>
    %cst_11 = arith.constant dense<0.000000e+00> : vector<128x32xf32>
    %10 = tpu.matmul %3, %9, %cst_11 {dimension_numbers = #tpu.dot_dimension_numbers<[1], [0], [0], [1], [0, 0, 1, 1], [], []>} : vector<128x64xf32>, vector<64x32xf32>, vector<128x32xf32> -> vector<128x32xf32>
    %c0_12 = arith.constant 0 : index
    %c0_13 = arith.constant 0 : index
    %11 = vector.load %arg7[%c0_12, %c0_13] : memref<1x32xf32, #tpu.memory_space<vmem>>, vector<1x32xf32>
    %12 = vector.broadcast %11 : vector<1x32xf32> to vector<128x32xf32>
    %13 = arith.addf %10, %12 : vector<128x32xf32>
    %c0_14 = arith.constant 0 : index
    %c0_15 = arith.constant 0 : index
    %14 = vector.load %arg8[%c0_14, %c0_15] : memref<64x32xf32, #tpu.memory_space<vmem>>, vector<64x32xf32>
    %cst_16 = arith.constant dense<0.000000e+00> : vector<128x32xf32>
    %15 = tpu.matmul %3, %14, %cst_16 {dimension_numbers = #tpu.dot_dimension_numbers<[1], [0], [0], [1], [0, 0, 1, 1], [], []>} : vector<128x64xf32>, vector<64x32xf32>, vector<128x32xf32> -> vector<128x32xf32>
    %c0_17 = arith.constant 0 : index
    %c0_18 = arith.constant 0 : index
    %16 = vector.load %arg9[%c0_17, %c0_18] : memref<1x32xf32, #tpu.memory_space<vmem>>, vector<1x32xf32>
    %17 = vector.broadcast %16 : vector<1x32xf32> to vector<128x32xf32>
    %18 = arith.addf %15, %17 : vector<128x32xf32>
    %19 = tpu.iota {dimensions = array<i32: 1>} : vector<1x128xi32>
    %c8_i32 = arith.constant 8 : i32
    %20 = vector.broadcast %c8_i32 : i32 to vector<1x128xi32>
    %21 = arith.cmpi slt, %19, %20 : vector<1x128xi32>
    %cst_19 = arith.constant 0.000000e+00 : f32
    %cst_20 = arith.constant -1.000000e+30 : f32
    %22 = vector.broadcast %cst_19 : f32 to vector<1x128xf32>
    %23 = vector.broadcast %cst_20 : f32 to vector<1x128xf32>
    %24 = arith.select %21, %22, %23 : vector<1x128xi1>, vector<1x128xf32>
    %cst_21 = arith.constant 0.000000e+00 : f32
    %25 = vector.broadcast %cst_21 : f32 to vector<16x32xf32>
    %26 = vector.extract_strided_slice %8 {offsets = [0, 0], sizes = [16, 8], strides = [1, 1]} : vector<16x32xf32> to vector<16x8xf32>
    %27 = vector.extract_strided_slice %13 {offsets = [0, 0], sizes = [128, 8], strides = [1, 1]} : vector<128x32xf32> to vector<128x8xf32>
    %28 = vector.extract_strided_slice %18 {offsets = [0, 0], sizes = [128, 8], strides = [1, 1]} : vector<128x32xf32> to vector<128x8xf32>
    %cst_22 = arith.constant dense<0.000000e+00> : vector<16x128xf32>
    %29 = tpu.matmul %26, %27, %cst_22 {dimension_numbers = #tpu.dot_dimension_numbers<[1], [1], [0], [0], [0, 0, 1, 0], [], []>} : vector<16x8xf32>, vector<128x8xf32>, vector<16x128xf32> -> vector<16x128xf32>
    %30 = vector.broadcast %24 : vector<1x128xf32> to vector<16x128xf32>
    %31 = arith.addf %29, %30 : vector<16x128xf32>
    %cst_23 = arith.constant dense<0xFF800000> : vector<16xf32>
    %32 = vector.multi_reduction <maximumf>, %31, %cst_23 [1] : vector<16x128xf32> to vector<16xf32>
    %33 = vector.shape_cast %32 : vector<16xf32> to vector<16x1xf32>
    %34 = vector.broadcast %33 : vector<16x1xf32> to vector<16x128xf32>
    %35 = arith.subf %31, %34 : vector<16x128xf32>
    %36 = math.exp %35 : vector<16x128xf32>
    %cst_24 = arith.constant dense<0.000000e+00> : vector<16xf32>
    %37 = vector.multi_reduction <add>, %36, %cst_24 [1] : vector<16x128xf32> to vector<16xf32>
    %38 = vector.shape_cast %37 : vector<16xf32> to vector<16x1xf32>
    %39 = tpu.reciprocal %38 {approx = true} : vector<16x1xf32> -> vector<16x1xf32>
    %cst_25 = arith.constant dense<0.000000e+00> : vector<16x8xf32>
    %40 = tpu.matmul %36, %28, %cst_25 {dimension_numbers = #tpu.dot_dimension_numbers<[1], [0], [0], [1], [0, 0, 1, 1], [], []>} : vector<16x128xf32>, vector<128x8xf32>, vector<16x8xf32> -> vector<16x8xf32>
    %41 = vector.broadcast %39 : vector<16x1xf32> to vector<16x8xf32>
    %42 = arith.mulf %40, %41 : vector<16x8xf32>
    %c0_26 = arith.constant 0 : index
    %c0_27 = arith.constant 0 : index
    %43 = vector.load %arg10[%c0_26, %c0_27] : memref<32x32xf32, #tpu.memory_space<vmem>>, vector<8x32xf32>
    %cst_28 = arith.constant dense<0.000000e+00> : vector<16x32xf32>
    %44 = tpu.matmul %42, %43, %cst_28 {dimension_numbers = #tpu.dot_dimension_numbers<[1], [0], [0], [1], [0, 0, 1, 1], [], []>} : vector<16x8xf32>, vector<8x32xf32>, vector<16x32xf32> -> vector<16x32xf32>
    %45 = arith.addf %25, %44 : vector<16x32xf32>
    %46 = vector.extract_strided_slice %8 {offsets = [0, 8], sizes = [16, 8], strides = [1, 1]} : vector<16x32xf32> to vector<16x8xf32>
    %47 = vector.extract_strided_slice %13 {offsets = [0, 8], sizes = [128, 8], strides = [1, 1]} : vector<128x32xf32> to vector<128x8xf32>
    %48 = vector.extract_strided_slice %18 {offsets = [0, 8], sizes = [128, 8], strides = [1, 1]} : vector<128x32xf32> to vector<128x8xf32>
    %cst_29 = arith.constant dense<0.000000e+00> : vector<16x128xf32>
    %49 = tpu.matmul %46, %47, %cst_29 {dimension_numbers = #tpu.dot_dimension_numbers<[1], [1], [0], [0], [0, 0, 1, 0], [], []>} : vector<16x8xf32>, vector<128x8xf32>, vector<16x128xf32> -> vector<16x128xf32>
    %50 = vector.broadcast %24 : vector<1x128xf32> to vector<16x128xf32>
    %51 = arith.addf %49, %50 : vector<16x128xf32>
    %cst_30 = arith.constant dense<0xFF800000> : vector<16xf32>
    %52 = vector.multi_reduction <maximumf>, %51, %cst_30 [1] : vector<16x128xf32> to vector<16xf32>
    %53 = vector.shape_cast %52 : vector<16xf32> to vector<16x1xf32>
    %54 = vector.broadcast %53 : vector<16x1xf32> to vector<16x128xf32>
    %55 = arith.subf %51, %54 : vector<16x128xf32>
    %56 = math.exp %55 : vector<16x128xf32>
    %cst_31 = arith.constant dense<0.000000e+00> : vector<16xf32>
    %57 = vector.multi_reduction <add>, %56, %cst_31 [1] : vector<16x128xf32> to vector<16xf32>
    %58 = vector.shape_cast %57 : vector<16xf32> to vector<16x1xf32>
    %59 = tpu.reciprocal %58 {approx = true} : vector<16x1xf32> -> vector<16x1xf32>
    %cst_32 = arith.constant dense<0.000000e+00> : vector<16x8xf32>
    %60 = tpu.matmul %56, %48, %cst_32 {dimension_numbers = #tpu.dot_dimension_numbers<[1], [0], [0], [1], [0, 0, 1, 1], [], []>} : vector<16x128xf32>, vector<128x8xf32>, vector<16x8xf32> -> vector<16x8xf32>
    %61 = vector.broadcast %59 : vector<16x1xf32> to vector<16x8xf32>
    %62 = arith.mulf %60, %61 : vector<16x8xf32>
    %c8 = arith.constant 8 : index
    %c0_33 = arith.constant 0 : index
    %63 = vector.load %arg10[%c8, %c0_33] : memref<32x32xf32, #tpu.memory_space<vmem>>, vector<8x32xf32>
    %cst_34 = arith.constant dense<0.000000e+00> : vector<16x32xf32>
    %64 = tpu.matmul %62, %63, %cst_34 {dimension_numbers = #tpu.dot_dimension_numbers<[1], [0], [0], [1], [0, 0, 1, 1], [], []>} : vector<16x8xf32>, vector<8x32xf32>, vector<16x32xf32> -> vector<16x32xf32>
    %65 = arith.addf %45, %64 : vector<16x32xf32>
    %66 = vector.extract_strided_slice %8 {offsets = [0, 16], sizes = [16, 8], strides = [1, 1]} : vector<16x32xf32> to vector<16x8xf32>
    %67 = vector.extract_strided_slice %13 {offsets = [0, 16], sizes = [128, 8], strides = [1, 1]} : vector<128x32xf32> to vector<128x8xf32>
    %68 = vector.extract_strided_slice %18 {offsets = [0, 16], sizes = [128, 8], strides = [1, 1]} : vector<128x32xf32> to vector<128x8xf32>
    %cst_35 = arith.constant dense<0.000000e+00> : vector<16x128xf32>
    %69 = tpu.matmul %66, %67, %cst_35 {dimension_numbers = #tpu.dot_dimension_numbers<[1], [1], [0], [0], [0, 0, 1, 0], [], []>} : vector<16x8xf32>, vector<128x8xf32>, vector<16x128xf32> -> vector<16x128xf32>
    %70 = vector.broadcast %24 : vector<1x128xf32> to vector<16x128xf32>
    %71 = arith.addf %69, %70 : vector<16x128xf32>
    %cst_36 = arith.constant dense<0xFF800000> : vector<16xf32>
    %72 = vector.multi_reduction <maximumf>, %71, %cst_36 [1] : vector<16x128xf32> to vector<16xf32>
    %73 = vector.shape_cast %72 : vector<16xf32> to vector<16x1xf32>
    %74 = vector.broadcast %73 : vector<16x1xf32> to vector<16x128xf32>
    %75 = arith.subf %71, %74 : vector<16x128xf32>
    %76 = math.exp %75 : vector<16x128xf32>
    %cst_37 = arith.constant dense<0.000000e+00> : vector<16xf32>
    %77 = vector.multi_reduction <add>, %76, %cst_37 [1] : vector<16x128xf32> to vector<16xf32>
    %78 = vector.shape_cast %77 : vector<16xf32> to vector<16x1xf32>
    %79 = tpu.reciprocal %78 {approx = true} : vector<16x1xf32> -> vector<16x1xf32>
    %cst_38 = arith.constant dense<0.000000e+00> : vector<16x8xf32>
    %80 = tpu.matmul %76, %68, %cst_38 {dimension_numbers = #tpu.dot_dimension_numbers<[1], [0], [0], [1], [0, 0, 1, 1], [], []>} : vector<16x128xf32>, vector<128x8xf32>, vector<16x8xf32> -> vector<16x8xf32>
    %81 = vector.broadcast %79 : vector<16x1xf32> to vector<16x8xf32>
    %82 = arith.mulf %80, %81 : vector<16x8xf32>
    %c16 = arith.constant 16 : index
    %c0_39 = arith.constant 0 : index
    %83 = vector.load %arg10[%c16, %c0_39] : memref<32x32xf32, #tpu.memory_space<vmem>>, vector<8x32xf32>
    %cst_40 = arith.constant dense<0.000000e+00> : vector<16x32xf32>
    %84 = tpu.matmul %82, %83, %cst_40 {dimension_numbers = #tpu.dot_dimension_numbers<[1], [0], [0], [1], [0, 0, 1, 1], [], []>} : vector<16x8xf32>, vector<8x32xf32>, vector<16x32xf32> -> vector<16x32xf32>
    %85 = arith.addf %65, %84 : vector<16x32xf32>
    %86 = vector.extract_strided_slice %8 {offsets = [0, 24], sizes = [16, 8], strides = [1, 1]} : vector<16x32xf32> to vector<16x8xf32>
    %87 = vector.extract_strided_slice %13 {offsets = [0, 24], sizes = [128, 8], strides = [1, 1]} : vector<128x32xf32> to vector<128x8xf32>
    %88 = vector.extract_strided_slice %18 {offsets = [0, 24], sizes = [128, 8], strides = [1, 1]} : vector<128x32xf32> to vector<128x8xf32>
    %cst_41 = arith.constant dense<0.000000e+00> : vector<16x128xf32>
    %89 = tpu.matmul %86, %87, %cst_41 {dimension_numbers = #tpu.dot_dimension_numbers<[1], [1], [0], [0], [0, 0, 1, 0], [], []>} : vector<16x8xf32>, vector<128x8xf32>, vector<16x128xf32> -> vector<16x128xf32>
    %90 = vector.broadcast %24 : vector<1x128xf32> to vector<16x128xf32>
    %91 = arith.addf %89, %90 : vector<16x128xf32>
    %cst_42 = arith.constant dense<0xFF800000> : vector<16xf32>
    %92 = vector.multi_reduction <maximumf>, %91, %cst_42 [1] : vector<16x128xf32> to vector<16xf32>
    %93 = vector.shape_cast %92 : vector<16xf32> to vector<16x1xf32>
    %94 = vector.broadcast %93 : vector<16x1xf32> to vector<16x128xf32>
    %95 = arith.subf %91, %94 : vector<16x128xf32>
    %96 = math.exp %95 : vector<16x128xf32>
    %cst_43 = arith.constant dense<0.000000e+00> : vector<16xf32>
    %97 = vector.multi_reduction <add>, %96, %cst_43 [1] : vector<16x128xf32> to vector<16xf32>
    %98 = vector.shape_cast %97 : vector<16xf32> to vector<16x1xf32>
    %99 = tpu.reciprocal %98 {approx = true} : vector<16x1xf32> -> vector<16x1xf32>
    %cst_44 = arith.constant dense<0.000000e+00> : vector<16x8xf32>
    %100 = tpu.matmul %96, %88, %cst_44 {dimension_numbers = #tpu.dot_dimension_numbers<[1], [0], [0], [1], [0, 0, 1, 1], [], []>} : vector<16x128xf32>, vector<128x8xf32>, vector<16x8xf32> -> vector<16x8xf32>
    %101 = vector.broadcast %99 : vector<16x1xf32> to vector<16x8xf32>
    %102 = arith.mulf %100, %101 : vector<16x8xf32>
    %c24 = arith.constant 24 : index
    %c0_45 = arith.constant 0 : index
    %103 = vector.load %arg10[%c24, %c0_45] : memref<32x32xf32, #tpu.memory_space<vmem>>, vector<8x32xf32>
    %cst_46 = arith.constant dense<0.000000e+00> : vector<16x32xf32>
    %104 = tpu.matmul %102, %103, %cst_46 {dimension_numbers = #tpu.dot_dimension_numbers<[1], [0], [0], [1], [0, 0, 1, 1], [], []>} : vector<16x8xf32>, vector<8x32xf32>, vector<16x32xf32> -> vector<16x32xf32>
    %105 = arith.addf %85, %104 : vector<16x32xf32>
    %c0_47 = arith.constant 0 : index
    %c0_48 = arith.constant 0 : index
    %106 = vector.load %arg11[%c0_47, %c0_48] : memref<1x32xf32, #tpu.memory_space<vmem>>, vector<1x32xf32>
    %107 = vector.broadcast %106 : vector<1x32xf32> to vector<16x32xf32>
    %108 = arith.addf %105, %107 : vector<16x32xf32>
    %c0_49 = arith.constant 0 : index
    %c0_50 = arith.constant 0 : index
    %c0_51 = arith.constant 0 : index
    %109 = vector.load %arg12[%c0_49, %c0_50, %c0_51] : memref<1x16x32xf32, #tpu.memory_space<vmem>>, vector<1x16x32xf32>
    %110 = vector.shape_cast %109 : vector<1x16x32xf32> to vector<16x32xf32>
    %111 = vector.shape_cast %108 : vector<16x32xf32> to vector<1x16x32xf32>
    tpu.vector_store %arg12[%c0_49, %c0_50, %c0_51], %111 {strides = array<i32>} : memref<1x16x32xf32, #tpu.memory_space<vmem>>, vector<1x16x32xf32>,
    return
  }
  func.func @transform_0(%arg0: i32, %arg1: i32) -> (i32, i32, i32) {
    %c0_i32 = arith.constant 0 : i32
    %c0_i32_0 = arith.constant 0 : i32
    return %arg0, %arg1, %c0_i32 : i32, i32, i32
  }
  func.func @transform_1(%arg0: i32, %arg1: i32) -> (i32, i32, i32) {
    %c0_i32 = arith.constant 0 : i32
    %c0_i32_0 = arith.constant 0 : i32
    %c0_i32_1 = arith.constant 0 : i32
    return %arg0, %c0_i32, %c0_i32_0 : i32, i32, i32
  }
  func.func @transform_2(%arg0: i32, %arg1: i32) -> (i32, i32) {
    %c0_i32 = arith.constant 0 : i32
    %c0_i32_0 = arith.constant 0 : i32
    %c0_i32_1 = arith.constant 0 : i32
    return %c0_i32, %c0_i32_0 : i32, i32
  }
  func.func @transform_3(%arg0: i32, %arg1: i32) -> (i32, i32) {
    %c0_i32 = arith.constant 0 : i32
    %c0_i32_0 = arith.constant 0 : i32
    %c0_i32_1 = arith.constant 0 : i32
    return %c0_i32, %c0_i32_0 : i32, i32
  }
  func.func @transform_4(%arg0: i32, %arg1: i32) -> (i32, i32) {
    %c0_i32 = arith.constant 0 : i32
    %c0_i32_0 = arith.constant 0 : i32
    %c0_i32_1 = arith.constant 0 : i32
    return %c0_i32, %c0_i32_0 : i32, i32
  }
  func.func @transform_5(%arg0: i32, %arg1: i32) -> (i32, i32) {
    %c0_i32 = arith.constant 0 : i32
    %c0_i32_0 = arith.constant 0 : i32
    %c0_i32_1 = arith.constant 0 : i32
    return %c0_i32, %c0_i32_0 : i32, i32
  }
  func.func @transform_6(%arg0: i32, %arg1: i32) -> (i32, i32) {
    %c0_i32 = arith.constant 0 : i32
    %c0_i32_0 = arith.constant 0 : i32
    %c0_i32_1 = arith.constant 0 : i32
    return %c0_i32, %c0_i32_0 : i32, i32
  }
  func.func @transform_7(%arg0: i32, %arg1: i32) -> (i32, i32) {
    %c0_i32 = arith.constant 0 : i32
    %c0_i32_0 = arith.constant 0 : i32
    %c0_i32_1 = arith.constant 0 : i32
    return %c0_i32, %c0_i32_0 : i32, i32
  }
  func.func @transform_8(%arg0: i32, %arg1: i32) -> (i32, i32) {
    %c0_i32 = arith.constant 0 : i32
    %c0_i32_0 = arith.constant 0 : i32
    %c0_i32_1 = arith.constant 0 : i32
    return %c0_i32, %c0_i32_0 : i32, i32
  }
  func.func @transform_9(%arg0: i32, %arg1: i32) -> (i32, i32) {
    %c0_i32 = arith.constant 0 : i32
    %c0_i32_0 = arith.constant 0 : i32
    %c0_i32_1 = arith.constant 0 : i32
    return %c0_i32, %c0_i32_0 : i32, i32
  }
  func.func @transform_10(%arg0: i32, %arg1: i32) -> (i32, i32, i32) {
    %c0_i32 = arith.constant 0 : i32
    %c0_i32_0 = arith.constant 0 : i32
    return %arg0, %arg1, %c0_i32 : i32, i32, i32
  }
}

</mosaic_0001>

<llo_original>
// kernel: tpu_custom_call.1
$region0: #{tpu_custom_call.1}
  #allocation0 [shape = 'u32[]', space=smem, size = 0x4, offset = 0x4, fixed_abs, tag = 'smem constant byte address 0x4 - core index']
  #allocation1 [shape = 'u32[144,128]{1,0:T(1,128)}', space=vmem, size = 0x12000, scoped, tag = 'internal scratch']
  %s0 = inlined_call_operand.vmem [shape: f32[2,16,32], index: 0, kind: input, shape index: {}]
  %s1 = inlined_call_operand.vmem [shape: f32[2,128,64], index: 1, kind: input, shape index: {}]
  %s2 = inlined_call_operand.vmem [shape: f32[32,32], index: 2, kind: input, shape index: {}]
  %s3 = inlined_call_operand.vmem [shape: f32[1,32], index: 3, kind: input, shape index: {}]
  %s4 = inlined_call_operand.vmem [shape: f32[64,32], index: 4, kind: input, shape index: {}]
  %s5 = inlined_call_operand.vmem [shape: f32[1,32], index: 5, kind: input, shape index: {}]
  %s6 = inlined_call_operand.vmem [shape: f32[64,32], index: 6, kind: input, shape index: {}]
  %s7 = inlined_call_operand.vmem [shape: f32[1,32], index: 7, kind: input, shape index: {}]
  %s8 = inlined_call_operand.vmem [shape: f32[32,32], index: 8, kind: input, shape index: {}]
  %s9 = inlined_call_operand.vmem [shape: f32[1,32], index: 9, kind: input, shape index: {}]
  %s10 = inlined_call_operand.hbm [shape: f32[2,16,32], index: 10, kind: output, shape index: {}]
  %s11 = sld [smem:[#allocation0]]
  $region73: #{tpu_custom_call.1} parent=0
    _
  %s13 = ssub.s32 1, %s11
  %s14 = scalar_select 0, %s13, %s11
  $region1: #{tpu_custom_call.1} parent=0
    #allocation2 [shape = 'u8[16384]{0}', space=vmem, size = 0x4000, scoped, tag = 'output window, operand 0']
    #allocation3 [shape = 's32[2]{0}', space=sflag, size = 0x8, scoped, tag = 'scoped memory for tpu_custom_call.1']
    %15 = vsyncpa [#allocation3], 0
    %s16 = scalar_lea.sflag [#allocation3], 1
    %17 = vsyncpa %s16, 0
    loop: start=0, step=1, limit=4
    $region2: #{tpu_custom_call.1} parent=1 // loop_pre_header
      _
    $region3: #{tpu_custom_call.1} parent=1 // loop_header
      %s19 = sphi 0, %s23
      %p20 = scmp.ge.s32.totalorder %s19, 4
      %s26 = sphi 0, %s38
      %s27 = sphi 0, %s34
      %s28 = sphi 0, %s26
      %s29 = sphi 0, %s27
      %s30 = sphi 0, %s28
      %s31 = sphi 0, %s29
      %s43 = sphi 0, %s45
      %s46 = sphi 0, %s43
      %s47 = sphi 0, %s46
      %s63 = sphi 0, %s47
      %s69 = sphi 0, %s71
      %s72 = sphi 0, %s69
      %s73 = sphi 0, %s72
      %s89 = sphi 0, %s73
      %s93 = sphi 0, %s93
      %s95 = sphi 0, %s93
      %s96 = sphi 0, %s95
      %s110 = sphi 0, %s96
      %s114 = sphi 0, %s114
      %s116 = sphi 0, %s114
      %s117 = sphi 0, %s116
      %s131 = sphi 0, %s117
      %s135 = sphi 0, %s135
      %s137 = sphi 0, %s135
      %s138 = sphi 0, %s137
      %s152 = sphi 0, %s138
      %s156 = sphi 0, %s156
      %s158 = sphi 0, %s156
      %s159 = sphi 0, %s158
      %s173 = sphi 0, %s159
      %s177 = sphi 0, %s177
      %s179 = sphi 0, %s177
      %s180 = sphi 0, %s179
      %s194 = sphi 0, %s180
      %s198 = sphi 0, %s198
      %s200 = sphi 0, %s198
      %s201 = sphi 0, %s200
      %s215 = sphi 0, %s201
      %s219 = sphi 0, %s219
      %s221 = sphi 0, %s219
      %s222 = sphi 0, %s221
      %s236 = sphi 0, %s222
      %s240 = sphi 0, %s240
      %s242 = sphi 0, %s240
      %s243 = sphi 0, %s242
      %s257 = sphi 0, %s243
      %s265 = sphi 0, %s267
      %s268 = sphi 0, %s265
      %s269 = sphi 0, %s268
      %s285 = sphi 0, %s269
    $region4: #{tpu_custom_call.1} parent=1 // loop_header_branch
      %22 = sbr.rel (%p20) target = $region8
    $region5: #{tpu_custom_call.1} parent=1 // loop_body
      %s24 = ssub.s32 %s19, 1
      %s25 = ssub.s32 %s19, 2
      %s32 = sadd.s32 1, %s27
      %p33 = scmp.ge.s32.totalorder %s32, 1
      %s34 = scalar_select %p33, 0, %s32
      %s35 = sadd.s32 1, %s26
      %s36 = scalar_select %p33, %s35, %s26
      %p37 = scmp.ge.s32.totalorder %s36, 2
      %s38 = scalar_select %p37, 0, %s36
      %s39 = ssub.s32 %s26, %s38
      %s40 = ssub.s32 %s27, %s34
      %s41 = sor.u32 %s39, %s40
      %p42 = scmp.eq.s32.totalorder %s41, 0
      %s44 = sadd.s32 %s43, 1
      %s45 = scalar_select %p42, %s43, %s44
      %p48 = pneg %p42
      %p49 = scmp.eq.s32.totalorder %s19, 1
      %p50 = por %p48, %p49
      %p51 = scmp.ne.s32.totalorder %s43, %s46
      %p52 = scmp.eq.s32.totalorder %s19, 0
      %p53 = por %p51, %p52
      %p54 = scmp.ne.s32.totalorder %s43, %s46
      %p55 = scmp.eq.s32.totalorder %s24, 1
      %p56 = por %p54, %p55
      %p57 = scmp.ne.s32.totalorder %s46, %s47
      %p58 = scmp.eq.s32.totalorder %s24, 0
      %p59 = por %p57, %p58
      %p60 = scmp.ne.s32.totalorder %s46, %s47
      %p61 = scmp.eq.s32.totalorder %s25, 1
      %p62 = por %p60, %p61
      %p64 = scmp.ne.s32.totalorder %s47, %s63
      %p65 = scmp.eq.s32.totalorder %s25, 0
      %p66 = por %p64, %p65
      %s67 = ssub.s32 %s26, %s38
      %p68 = scmp.eq.s32.totalorder %s67, 0
      %s70 = sadd.s32 %s69, 1
      %s71 = scalar_select %p68, %s69, %s70
      %p74 = pneg %p68
      %p75 = scmp.eq.s32.totalorder %s19, 1
      %p76 = por %p74, %p75
      %p77 = scmp.ne.s32.totalorder %s69, %s72
      %p78 = scmp.eq.s32.totalorder %s19, 0
      %p79 = por %p77, %p78
      %p80 = scmp.ne.s32.totalorder %s69, %s72
      %p81 = scmp.eq.s32.totalorder %s24, 1
      %p82 = por %p80, %p81
      %p83 = scmp.ne.s32.totalorder %s72, %s73
      %p84 = scmp.eq.s32.totalorder %s24, 0
      %p85 = por %p83, %p84
      %p86 = scmp.ne.s32.totalorder %s72, %s73
      %p87 = scmp.eq.s32.totalorder %s25, 1
      %p88 = por %p86, %p87
      %p90 = scmp.ne.s32.totalorder %s73, %s89
      %p91 = scmp.eq.s32.totalorder %s25, 0
      %p92 = por %p90, %p91
      %s94 = sadd.s32 %s93, 1
      %p97 = scmp.eq.s32.totalorder %s19, 1
      %p98 = scmp.ne.s32.totalorder %s93, %s95
      %p99 = scmp.eq.s32.totalorder %s19, 0
      %p100 = por %p98, %p99
      %p101 = scmp.ne.s32.totalorder %s93, %s95
      %p102 = scmp.eq.s32.totalorder %s24, 1
      %p103 = por %p101, %p102
      %p104 = scmp.ne.s32.totalorder %s95, %s96
      %p105 = scmp.eq.s32.totalorder %s24, 0
      %p106 = por %p104, %p105
      %p107 = scmp.ne.s32.totalorder %s95, %s96
      %p108 = scmp.eq.s32.totalorder %s25, 1
      %p109 = por %p107, %p108
      %p111 = scmp.ne.s32.totalorder %s96, %s110
      %p112 = scmp.eq.s32.totalorder %s25, 0
      %p113 = por %p111, %p112
      %s115 = sadd.s32 %s114, 1
      %p118 = scmp.eq.s32.totalorder %s19, 1
      %p119 = scmp.ne.s32.totalorder %s114, %s116
      %p120 = scmp.eq.s32.totalorder %s19, 0
      %p121 = por %p119, %p120
      %p122 = scmp.ne.s32.totalorder %s114, %s116
      %p123 = scmp.eq.s32.totalorder %s24, 1
      %p124 = por %p122, %p123
      %p125 = scmp.ne.s32.totalorder %s116, %s117
      %p126 = scmp.eq.s32.totalorder %s24, 0
      %p127 = por %p125, %p126
      %p128 = scmp.ne.s32.totalorder %s116, %s117
      %p129 = scmp.eq.s32.totalorder %s25, 1
      %p130 = por %p128, %p129
      %p132 = scmp.ne.s32.totalorder %s117, %s131
      %p133 = scmp.eq.s32.totalorder %s25, 0
      %p134 = por %p132, %p133
      %s136 = sadd.s32 %s135, 1
      %p139 = scmp.eq.s32.totalorder %s19, 1
      %p140 = scmp.ne.s32.totalorder %s135, %s137
      %p141 = scmp.eq.s32.totalorder %s19, 0
      %p142 = por %p140, %p141
      %p143 = scmp.ne.s32.totalorder %s135, %s137
      %p144 = scmp.eq.s32.totalorder %s24, 1
      %p145 = por %p143, %p144
      %p146 = scmp.ne.s32.totalorder %s137, %s138
      %p147 = scmp.eq.s32.totalorder %s24, 0
      %p148 = por %p146, %p147
      %p149 = scmp.ne.s32.totalorder %s137, %s138
      %p150 = scmp.eq.s32.totalorder %s25, 1
      %p151 = por %p149, %p150
      %p153 = scmp.ne.s32.totalorder %s138, %s152
      %p154 = scmp.eq.s32.totalorder %s25, 0
      %p155 = por %p153, %p154
      %s157 = sadd.s32 %s156, 1
      %p160 = scmp.eq.s32.totalorder %s19, 1
      %p161 = scmp.ne.s32.totalorder %s156, %s158
      %p162 = scmp.eq.s32.totalorder %s19, 0
      %p163 = por %p161, %p162
      %p164 = scmp.ne.s32.totalorder %s156, %s158
      %p165 = scmp.eq.s32.totalorder %s24, 1
      %p166 = por %p164, %p165
      %p167 = scmp.ne.s32.totalorder %s158, %s159
      %p168 = scmp.eq.s32.totalorder %s24, 0
      %p169 = por %p167, %p168
      %p170 = scmp.ne.s32.totalorder %s158, %s159
      %p171 = scmp.eq.s32.totalorder %s25, 1
      %p172 = por %p170, %p171
      %p174 = scmp.ne.s32.totalorder %s159, %s173
      %p175 = scmp.eq.s32.totalorder %s25, 0
      %p176 = por %p174, %p175
      %s178 = sadd.s32 %s177, 1
      %p181 = scmp.eq.s32.totalorder %s19, 1
      %p182 = scmp.ne.s32.totalorder %s177, %s179
      %p183 = scmp.eq.s32.totalorder %s19, 0
      %p184 = por %p182, %p183
      %p185 = scmp.ne.s32.totalorder %s177, %s179
      %p186 = scmp.eq.s32.totalorder %s24, 1
      %p187 = por %p185, %p186
      %p188 = scmp.ne.s32.totalorder %s179, %s180
      %p189 = scmp.eq.s32.totalorder %s24, 0
      %p190 = por %p188, %p189
      %p191 = scmp.ne.s32.totalorder %s179, %s180
      %p192 = scmp.eq.s32.totalorder %s25, 1
      %p193 = por %p191, %p192
      %p195 = scmp.ne.s32.totalorder %s180, %s194
      %p196 = scmp.eq.s32.totalorder %s25, 0
      %p197 = por %p195, %p196
      %s199 = sadd.s32 %s198, 1
      %p202 = scmp.eq.s32.totalorder %s19, 1
      %p203 = scmp.ne.s32.totalorder %s198, %s200
      %p204 = scmp.eq.s32.totalorder %s19, 0
      %p205 = por %p203, %p204
      %p206 = scmp.ne.s32.totalorder %s198, %s200
      %p207 = scmp.eq.s32.totalorder %s24, 1
      %p208 = por %p206, %p207
      %p209 = scmp.ne.s32.totalorder %s200, %s201
      %p210 = scmp.eq.s32.totalorder %s24, 0
      %p211 = por %p209, %p210
      %p212 = scmp.ne.s32.totalorder %s200, %s201
      %p213 = scmp.eq.s32.totalorder %s25, 1
      %p214 = por %p212, %p213
      %p216 = scmp.ne.s32.totalorder %s201, %s215
      %p217 = scmp.eq.s32.totalorder %s25, 0
      %p218 = por %p216, %p217
      %s220 = sadd.s32 %s219, 1
      %p223 = scmp.eq.s32.totalorder %s19, 1
      %p224 = scmp.ne.s32.totalorder %s219, %s221
      %p225 = scmp.eq.s32.totalorder %s19, 0
      %p226 = por %p224, %p225
      %p227 = scmp.ne.s32.totalorder %s219, %s221
      %p228 = scmp.eq.s32.totalorder %s24, 1
      %p229 = por %p227, %p228
      %p230 = scmp.ne.s32.totalorder %s221, %s222
      %p231 = scmp.eq.s32.totalorder %s24, 0
      %p232 = por %p230, %p231
      %p233 = scmp.ne.s32.totalorder %s221, %s222
      %p234 = scmp.eq.s32.totalorder %s25, 1
      %p235 = por %p233, %p234
      %p237 = scmp.ne.s32.totalorder %s222, %s236
      %p238 = scmp.eq.s32.totalorder %s25, 0
      %p239 = por %p237, %p238
      %s241 = sadd.s32 %s240, 1
      %p244 = scmp.eq.s32.totalorder %s19, 1
      %p245 = scmp.ne.s32.totalorder %s240, %s242
      %p246 = scmp.eq.s32.totalorder %s19, 0
      %p247 = por %p245, %p246
      %p248 = scmp.ne.s32.totalorder %s240, %s242
      %p249 = scmp.eq.s32.totalorder %s24, 1
      %p250 = por %p248, %p249
      %p251 = scmp.ne.s32.totalorder %s242, %s243
      %p252 = scmp.eq.s32.totalorder %s24, 0
      %p253 = por %p251, %p252
      %p254 = scmp.ne.s32.totalorder %s242, %s243
      %p255 = scmp.eq.s32.totalorder %s25, 1
      %p256 = por %p254, %p255
      %p258 = scmp.ne.s32.totalorder %s243, %s257
      %p259 = scmp.eq.s32.totalorder %s25, 0
      %p260 = por %p258, %p259
      %s261 = ssub.s32 %s26, %s38
      %s262 = ssub.s32 %s27, %s34
      %s263 = sor.u32 %s261, %s262
      %p264 = scmp.eq.s32.totalorder %s263, 0
      %s266 = sadd.s32 %s265, 1
      %s267 = scalar_select %p264, %s265, %s266
      %p270 = pneg %p264
      %p271 = scmp.eq.s32.totalorder %s19, 1
      %p272 = por %p270, %p271
      %p273 = scmp.ne.s32.totalorder %s265, %s268
      %p274 = scmp.eq.s32.totalorder %s19, 0
      %p275 = por %p273, %p274
      %p276 = scmp.ne.s32.totalorder %s265, %s268
      %p277 = scmp.eq.s32.totalorder %s24, 1
      %p278 = por %p276, %p277
      %p279 = scmp.ne.s32.totalorder %s268, %s269
      %p280 = scmp.eq.s32.totalorder %s24, 0
      %p281 = por %p279, %p280
      %p282 = scmp.ne.s32.totalorder %s268, %s269
      %p283 = scmp.eq.s32.totalorder %s25, 1
      %p284 = por %p282, %p283
      %p286 = scmp.ne.s32.totalorder %s269, %s285
      %p287 = scmp.eq.s32.totalorder %s25, 0
      %p288 = por %p286, %p287
      %p289 = scmp.le.s32.totalorder 1, %s19
      %p290 = scmp.lt.s32.totalorder %s19, 3
      %p291 = pnand %p289, %p290
      %p292 = pneg %p291
      // Predicated region
      $region9: #{tpu_custom_call.1} parent=5 // pred_check
        _
      $region10: #{tpu_custom_call.1} parent=5 // pred_check_branch
        %294 = sbr.rel (%p291) target = $region12
      $region11: #{tpu_custom_call.1} parent=5 // pred_region
        %s295 = ssub.s32 %s19, 1
        // Predicated region
        $region13: #{tpu_custom_call.1} parent=11 // pred_check
          %p296 = pneg %p106
        $region14: #{tpu_custom_call.1} parent=11 // pred_check_branch
          %298 = sbr.rel (%p296) target = $region16
        $region15: #{tpu_custom_call.1} parent=11 // pred_region
          _
        $region16: #{tpu_custom_call.1} parent=11 // pred_fallthru
          _
        // Predicated region
        $region17: #{tpu_custom_call.1} parent=11 // pred_check
          %p299 = pneg %p127
        $region18: #{tpu_custom_call.1} parent=11 // pred_check_branch
          %301 = sbr.rel (%p299) target = $region20
        $region19: #{tpu_custom_call.1} parent=11 // pred_region
          _
        $region20: #{tpu_custom_call.1} parent=11 // pred_fallthru
          _
        // Predicated region
        $region21: #{tpu_custom_call.1} parent=11 // pred_check
          %p302 = pneg %p148
        $region22: #{tpu_custom_call.1} parent=11 // pred_check_branch
          %304 = sbr.rel (%p302) target = $region24
        $region23: #{tpu_custom_call.1} parent=11 // pred_region
          _
        $region24: #{tpu_custom_call.1} parent=11 // pred_fallthru
          _
        // Predicated region
        $region25: #{tpu_custom_call.1} parent=11 // pred_check
          %p305 = pneg %p169
        $region26: #{tpu_custom_call.1} parent=11 // pred_check_branch
          %307 = sbr.rel (%p305) target = $region28
        $region27: #{tpu_custom_call.1} parent=11 // pred_region
          _
        $region28: #{tpu_custom_call.1} parent=11 // pred_fallthru
          _
        // Predicated region
        $region29: #{tpu_custom_call.1} parent=11 // pred_check
          %p308 = pneg %p190
        $region30: #{tpu_custom_call.1} parent=11 // pred_check_branch
          %310 = sbr.rel (%p308) target = $region32
        $region31: #{tpu_custom_call.1} parent=11 // pred_region
          _
        $region32: #{tpu_custom_call.1} parent=11 // pred_fallthru
          _
        // Predicated region
        $region33: #{tpu_custom_call.1} parent=11 // pred_check
          %p311 = pneg %p211
        $region34: #{tpu_custom_call.1} parent=11 // pred_check_branch
          %313 = sbr.rel (%p311) target = $region36
        $region35: #{tpu_custom_call.1} parent=11 // pred_region
          _
        $region36: #{tpu_custom_call.1} parent=11 // pred_fallthru
          _
        // Predicated region
        $region37: #{tpu_custom_call.1} parent=11 // pred_check
          %p314 = pneg %p232
        $region38: #{tpu_custom_call.1} parent=11 // pred_check_branch
          %316 = sbr.rel (%p314) target = $region40
        $region39: #{tpu_custom_call.1} parent=11 // pred_region
          _
        $region40: #{tpu_custom_call.1} parent=11 // pred_fallthru
          _
        // Predicated region
        $region41: #{tpu_custom_call.1} parent=11 // pred_check
          %p317 = pneg %p253
        $region42: #{tpu_custom_call.1} parent=11 // pred_check_branch
          %319 = sbr.rel (%p317) target = $region44
        $region43: #{tpu_custom_call.1} parent=11 // pred_region
          _
        $region44: #{tpu_custom_call.1} parent=11 // pred_fallthru
          _
      $region12: #{tpu_custom_call.1} parent=5 // pred_fallthru
        _
      %p320 = scmp.lt.s32.totalorder %s19, 2
      // Predicated region
      $region45: #{tpu_custom_call.1} parent=5 // pred_check
        %p321 = pneg %p320
      $region46: #{tpu_custom_call.1} parent=5 // pred_check_branch
        %323 = sbr.rel (%p321) target = $region48
      $region47: #{tpu_custom_call.1} parent=5 // pred_region
        // Predicated region
        $region49: #{tpu_custom_call.1} parent=47 // pred_check
          %p324 = pneg %p53
        $region50: #{tpu_custom_call.1} parent=47 // pred_check_branch
          %326 = sbr.rel (%p324) target = $region52
        $region51: #{tpu_custom_call.1} parent=47 // pred_region
          %s327 = smul.u32 2, %s27
          %p328 = scmp.lt.s32.totalorder %s26, 1
          %s329 = scalar_select %p328, %s26, 1
          %p330 = scmp.lt.s32.totalorder %s327, 1
          %s331 = scalar_select %p330, %s327, 1
          %s332 = smul.addr %s329, 2
          %s333 = sadd.s32 %s331, %s332
          %s334 = smul.addr %s333, 8
          %s335 = scalar_lea.vmem %s0, %s334
          %s336 = smul.u32 2, %s27
        $region52: #{tpu_custom_call.1} parent=47 // pred_fallthru
          _
        // Predicated region
        $region53: #{tpu_custom_call.1} parent=47 // pred_check
          %p337 = pneg %p79
        $region54: #{tpu_custom_call.1} parent=47 // pred_check_branch
          %339 = sbr.rel (%p337) target = $region56
        $region55: #{tpu_custom_call.1} parent=47 // pred_region
          %p340 = scmp.lt.s32.totalorder %s26, 1
          %s341 = scalar_select %p340, %s26, 1
          %s342 = smul.addr %s341, 16
          %s343 = smul.addr %s342, 8
          %s344 = scalar_lea.vmem %s1, %s343
        $region56: #{tpu_custom_call.1} parent=47 // pred_fallthru
          _
      $region48: #{tpu_custom_call.1} parent=5 // pred_fallthru
        _
      %p345 = scmp.le.s32.totalorder 1, %s19
      %p346 = scmp.lt.s32.totalorder %s19, 3
      %p347 = pnand %p345, %p346
      %p348 = pneg %p347
      // Predicated region
      $region57: #{tpu_custom_call.1} parent=5 // pred_check
        _
      $region58: #{tpu_custom_call.1} parent=5 // pred_check_branch
        %350 = sbr.rel (%p347) target = $region60
      $region59: #{tpu_custom_call.1} parent=5 // pred_region
        %s351 = ssub.s32 %s19, 1
        %s352 = smul.u32 2, %s29
        %p353 = scmp.lt.s32.totalorder %s28, 1
        %s354 = scalar_select %p353, %s28, 1
        %p355 = scmp.lt.s32.totalorder %s352, 1
        %s356 = scalar_select %p355, %s352, 1
        %s357 = smul.addr %s354, 2
        %s358 = sadd.s32 %s356, %s357
        %s359 = smul.addr %s358, 8
        %s360 = scalar_lea.vmem %s0, %s359
        %p361 = pneg %p59
        %p362 = pneg %p56
        %p363 = scmp.lt.s32.totalorder %s28, 1
        %s364 = scalar_select %p363, %s28, 1
        %s365 = smul.addr %s364, 16
        %s366 = smul.addr %s365, 8
        %s367 = scalar_lea.vmem %s1, %s366
        %p368 = pneg %p85
        %p369 = pneg %p82
        %p370 = pneg %p106
        %p371 = pneg %p103
        %p372 = pneg %p127
        %p373 = pneg %p124
        %p374 = pneg %p148
        %p375 = pneg %p145
        %p376 = pneg %p169
        %p377 = pneg %p166
        %p378 = pneg %p190
        %p379 = pneg %p187
        %p380 = pneg %p211
        %p381 = pneg %p208
        %p382 = pneg %p232
        %p383 = pneg %p229
        %p384 = pneg %p253
        %p385 = pneg %p250
        %p386 = pneg %p281
        %p387 = pneg %p278
        %s388 = sand.u32 %s268, 1
        %s389 = scalar_lea.sflag [#allocation3], %s388
        %s390 = sand.u32 %s268, 1
        %s391 = smul.addr %s390, 16
        %s392 = scalar_lea.vmem [#allocation2], %s391
        %s393 = smul.u32 2, %s29
        %p394 = scmp.lt.s32.totalorder %s28, 1
        %s395 = scalar_select %p394, %s28, 1
        %p396 = scmp.lt.s32.totalorder %s393, 1
        %s397 = scalar_select %p396, %s393, 1
        %s398 = smul.addr %s395, 2
        %s399 = sadd.s32 %s397, %s398
        %s400 = smul.addr %s399, 8
        %s401 = scalar_lea.vmem %s0, %s400
        %s402 = smul.u32 2, %s29
        %p403 = scmp.lt.s32.totalorder %s28, 1
        %s404 = scalar_select %p403, %s28, 1
        %s405 = smul.addr %s404, 16
        %s406 = smul.addr %s405, 8
        %s407 = scalar_lea.vmem %s1, %s406
        %s408 = smul.u32 2, %s29
        %v409 = vld [vmem:[%s401] sm:$0xff]
        %v410 = vld [vmem:[%s401 + $0x8] sm:$0xff]
        %v411 = vld [vmem:[%s407] sm:$0xff]
        %v412 = vld [vmem:[%s407 + $0x8] sm:$0xff]
        %v413 = vld [vmem:[%s407 + $0x10] sm:$0xff]
        %v414 = vld [vmem:[%s407 + $0x18] sm:$0xff]
        %v415 = vld [vmem:[%s407 + $0x20] sm:$0xff]
        %v416 = vld [vmem:[%s407 + $0x28] sm:$0xff]
        %v417 = vld [vmem:[%s407 + $0x30] sm:$0xff]
        %v418 = vld [vmem:[%s407 + $0x38] sm:$0xff]
        %v419 = vld [vmem:[%s407 + $0x40] sm:$0xff]
        %v420 = vld [vmem:[%s407 + $0x48] sm:$0xff]
        %v421 = vld [vmem:[%s407 + $0x50] sm:$0xff]
        %v422 = vld [vmem:[%s407 + $0x58] sm:$0xff]
        %v423 = vld [vmem:[%s407 + $0x60] sm:$0xff]
        %v424 = vld [vmem:[%s407 + $0x68] sm:$0xff]
        %v425 = vld [vmem:[%s407 + $0x70] sm:$0xff]
        %v426 = vld [vmem:[%s407 + $0x78] sm:$0xff]
        %v427 = vld [vmem:[%s2] sm:$0xff]
        %v428 = vld [vmem:[%s2 + $0x8] sm:$0xff]
        %v429 = vld [vmem:[%s2 + $0x10] sm:$0xff]
        %v430 = vld [vmem:[%s2 + $0x18] sm:$0xff]
        %v431 = vld [vmem:[%s3] sm:$0x1]
        %v433 = vlaneseq
        %v434 = vshrl.u32 %v433, 7
        %v435 = vsub.s32 0, %v434
        %v436 = vrot.slane %v431, %v435
        %vm438 = vcmask 261120
        %v440 = vsel %vm438, %v409, 0
        %v443 = vsel %vm438, %v410, 0
        %445 = vmatprep.subr.mxu0 0.0
        %446 = vmatpush1.msra.mxu0 %v427
        %447 = vmatprep.subr.mxu0 0.0
        %448 = vmatpush1.msra.mxu0 %v428
        %449 = vmatprep.subr.mxu0 0.0
        %450 = vmatpush1.msra.mxu0 %v429
        %451 = vmatprep.subr.mxu0 0.0
        %452 = vmatpush1.msra.mxu0 %v430
        %453 = vmatprep.subr.mxu0 0.0
        %454 = vmatpush1.msra.mxu0 0.0
        %455 = vmatprep.subr.mxu0 0.0
        %456 = vmatpush1.msra.mxu0 0.0
        %457 = vmatprep.subr.mxu0 0.0
        %458 = vmatpush1.msra.mxu0 0.0
        %459 = vmatprep.subr.mxu0 0.0
        %460 = vmatpush1.msra.mxu0 0.0
        %461 = vmatprep.subr.mxu0 0.0
        %462 = vmatpush1.msra.mxu0 0.0
        %463 = vmatprep.subr.mxu0 0.0
        %464 = vmatpush1.msra.mxu0 0.0
        %465 = vmatprep.subr.mxu0 0.0
        %466 = vmatpush1.msra.mxu0 0.0
        %467 = vmatprep.subr.mxu0 0.0
        %468 = vmatpush1.msra.mxu0 0.0
        %469 = vmatprep.subr.mxu0 0.0
        %470 = vmatpush1.msra.mxu0 0.0
        %471 = vmatprep.subr.mxu0 0.0
        %472 = vmatpush1.msra.mxu0 0.0
        %473 = vmatprep.subr.mxu0 0.0
        %474 = vmatpush1.msra.mxu0 0.0
        %475 = vmatprep.subr.mxu0 0.0
        %476 = vmatpush1.msra.mxu0 0.0
        %477 = vmatprep.subr.mxu0 0.0
        %478 = vmatpush1.msra.mxu0 0.0
        %479 = vmatprep.subr.mxu0 0.0
        %480 = vmatpush1.msra.mxu0 0.0
        %481 = vmatprep.subr.mxu0 0.0
        %482 = vmatpush1.msra.mxu0 0.0
        %483 = vmatprep.subr.mxu0 0.0
        %484 = vmatpush1.msra.mxu0 0.0
        %485 = vmatprep.subr.mxu0 0.0
        %486 = vmatpush1.msra.mxu0 0.0
        %487 = vmatprep.subr.mxu0 0.0
        %488 = vmatpush1.msra.mxu0 0.0
        %489 = vmatprep.subr.mxu0 0.0
        %490 = vmatpush1.msra.mxu0 0.0
        %491 = vmatprep.subr.mxu0 0.0
        %492 = vmatpush1.msra.mxu0 0.0
        %493 = vmatprep.subr.mxu0 0.0
        %494 = vmatpush1.msra.mxu0 0.0
        %495 = vmatprep.subr.mxu0 0.0
        %496 = vmatpush1.msra.mxu0 0.0
        %497 = vmatprep.subr.mxu0 0.0
        %498 = vmatpush1.msra.mxu0 0.0
        %499 = vmatprep.subr.mxu0 0.0
        %500 = vmatpush1.msra.mxu0 0.0
        %501 = vmatprep.subr.mxu0 0.0
        %502 = vmatpush1.msra.mxu0 0.0
        %503 = vmatprep.subr.mxu0 0.0
        %504 = vmatpush1.msra.mxu0 0.0
        %505 = vmatprep.subr.mxu0 0.0
        %506 = vmatpush1.msra.mxu0 0.0
        %507 = vmatprep.subr.mxu0 0.0
        %508 = vmatpush1.msra.mxu0 0.0
        %509 = vmatprep.mubr.f32.mxu0 0.0
        %510 = vmatmul.mubr.f32.gmra.mrb[0].mxu0 %v440
        %v511 = vpop.f32.mrb[0].mxu0
        %v512 = vadd.f32 %v436, %v511
        %v513 = vpop.f32.mrb[0].mxu0
        %514 = vmatprep.mubr.f32.mxu0 0.0
        %515 = vmatmul.mubr.f32.gmra.mrb[0].mxu0 %v443
        %v516 = vpop.f32.mrb[0].mxu0
        %v517 = vadd.f32 %v436, %v516
        %v518 = vpop.f32.mrb[0].mxu0
        %519 = vdwg.mxu0
        %v520 = vld [vmem:[%s4] sm:$0xff]
        %v521 = vld [vmem:[%s4 + $0x8] sm:$0xff]
        %v522 = vld [vmem:[%s4 + $0x10] sm:$0xff]
        %v523 = vld [vmem:[%s4 + $0x18] sm:$0xff]
        %v524 = vld [vmem:[%s4 + $0x20] sm:$0xff]
        %v525 = vld [vmem:[%s4 + $0x28] sm:$0xff]
        %v526 = vld [vmem:[%s4 + $0x30] sm:$0xff]
        %v527 = vld [vmem:[%s4 + $0x38] sm:$0xff]
        %v528 = vld [vmem:[%s5] sm:$0x1]
        %v530 = vlaneseq
        %v531 = vshrl.u32 %v530, 7
        %v532 = vsub.s32 0, %v531
        %v533 = vrot.slane %v528, %v532
        %vm535 = vcmask 523264
        %v537 = vsel %vm535, %v411, 0
        %v540 = vsel %vm535, %v412, 0
        %v543 = vsel %vm535, %v413, 0
        %v546 = vsel %vm535, %v414, 0
        %v549 = vsel %vm535, %v415, 0
        %v552 = vsel %vm535, %v416, 0
        %v555 = vsel %vm535, %v417, 0
        %v558 = vsel %vm535, %v418, 0
        %v561 = vsel %vm535, %v419, 0
        %v564 = vsel %vm535, %v420, 0
        %v567 = vsel %vm535, %v421, 0
        %v570 = vsel %vm535, %v422, 0
        %v573 = vsel %vm535, %v423, 0
        %v576 = vsel %vm535, %v424, 0
        %v579 = vsel %vm535, %v425, 0
        %v582 = vsel %vm535, %v426, 0
        %584 = vmatprep.subr.mxu0 0.0
        %585 = vmatpush1.msra.mxu0 %v520
        %586 = vmatprep.subr.mxu0 0.0
        %587 = vmatpush1.msra.mxu0 %v521
        %588 = vmatprep.subr.mxu0 0.0
        %589 = vmatpush1.msra.mxu0 %v522
        %590 = vmatprep.subr.mxu0 0.0
        %591 = vmatpush1.msra.mxu0 %v523
        %592 = vmatprep.subr.mxu0 0.0
        %593 = vmatpush1.msra.mxu0 %v524
        %594 = vmatprep.subr.mxu0 0.0
        %595 = vmatpush1.msra.mxu0 %v525
        %596 = vmatprep.subr.mxu0 0.0
        %597 = vmatpush1.msra.mxu0 %v526
        %598 = vmatprep.subr.mxu0 0.0
        %599 = vmatpush1.msra.mxu0 %v527
        %600 = vmatprep.subr.mxu0 0.0
        %601 = vmatpush1.msra.mxu0 0.0
        %602 = vmatprep.subr.mxu0 0.0
        %603 = vmatpush1.msra.mxu0 0.0
        %604 = vmatprep.subr.mxu0 0.0
        %605 = vmatpush1.msra.mxu0 0.0
        %606 = vmatprep.subr.mxu0 0.0
        %607 = vmatpush1.msra.mxu0 0.0
        %608 = vmatprep.subr.mxu0 0.0
        %609 = vmatpush1.msra.mxu0 0.0
        %610 = vmatprep.subr.mxu0 0.0
        %611 = vmatpush1.msra.mxu0 0.0
        %612 = vmatprep.subr.mxu0 0.0
        %613 = vmatpush1.msra.mxu0 0.0
        %614 = vmatprep.subr.mxu0 0.0
        %615 = vmatpush1.msra.mxu0 0.0
        %616 = vmatprep.subr.mxu0 0.0
        %617 = vmatpush1.msra.mxu0 0.0
        %618 = vmatprep.subr.mxu0 0.0
        %619 = vmatpush1.msra.mxu0 0.0
        %620 = vmatprep.subr.mxu0 0.0
        %621 = vmatpush1.msra.mxu0 0.0
        %622 = vmatprep.subr.mxu0 0.0
        %623 = vmatpush1.msra.mxu0 0.0
        %624 = vmatprep.subr.mxu0 0.0
        %625 = vmatpush1.msra.mxu0 0.0
        %626 = vmatprep.subr.mxu0 0.0
        %627 = vmatpush1.msra.mxu0 0.0
        %628 = vmatprep.subr.mxu0 0.0
        %629 = vmatpush1.msra.mxu0 0.0
        %630 = vmatprep.subr.mxu0 0.0
        %631 = vmatpush1.msra.mxu0 0.0
        %632 = vmatprep.subr.mxu0 0.0
        %633 = vmatpush1.msra.mxu0 0.0
        %634 = vmatprep.subr.mxu0 0.0
        %635 = vmatpush1.msra.mxu0 0.0
        %636 = vmatprep.subr.mxu0 0.0
        %637 = vmatpush1.msra.mxu0 0.0
        %638 = vmatprep.subr.mxu0 0.0
        %639 = vmatpush1.msra.mxu0 0.0
        %640 = vmatprep.subr.mxu0 0.0
        %641 = vmatpush1.msra.mxu0 0.0
        %642 = vmatprep.subr.mxu0 0.0
        %643 = vmatpush1.msra.mxu0 0.0
        %644 = vmatprep.subr.mxu0 0.0
        %645 = vmatpush1.msra.mxu0 0.0
        %646 = vmatprep.subr.mxu0 0.0
        %647 = vmatpush1.msra.mxu0 0.0
        %648 = vmatprep.mubr.f32.mxu0 0.0
        %649 = vmatmul.mubr.f32.gmra.mrb[0].mxu0 %v537
        %v650 = vpop.f32.mrb[0].mxu0
        %v651 = vadd.f32 %v533, %v650
        %v652 = vpop.f32.mrb[0].mxu0
        %653 = vmatprep.mubr.f32.mxu0 0.0
        %654 = vmatmul.mubr.f32.gmra.mrb[0].mxu0 %v540
        %v655 = vpop.f32.mrb[0].mxu0
        %v656 = vadd.f32 %v533, %v655
        %v657 = vpop.f32.mrb[0].mxu0
        %658 = vmatprep.mubr.f32.mxu0 0.0
        %659 = vmatmul.mubr.f32.gmra.mrb[0].mxu0 %v543
        %v660 = vpop.f32.mrb[0].mxu0
        %v661 = vadd.f32 %v533, %v660
        %v662 = vpop.f32.mrb[0].mxu0
        %663 = vmatprep.mubr.f32.mxu0 0.0
        %664 = vmatmul.mubr.f32.gmra.mrb[0].mxu0 %v546
        %v665 = vpop.f32.mrb[0].mxu0
        %v666 = vadd.f32 %v533, %v665
        %v667 = vpop.f32.mrb[0].mxu0
        %668 = vmatprep.mubr.f32.mxu0 0.0
        %669 = vmatmul.mubr.f32.gmra.mrb[0].mxu0 %v549
        %v670 = vpop.f32.mrb[0].mxu0
        %v671 = vadd.f32 %v533, %v670
        %v672 = vpop.f32.mrb[0].mxu0
        %673 = vmatprep.mubr.f32.mxu0 0.0
        %674 = vmatmul.mubr.f32.gmra.mrb[0].mxu0 %v552
        %v675 = vpop.f32.mrb[0].mxu0
        %v676 = vadd.f32 %v533, %v675
        %v677 = vpop.f32.mrb[0].mxu0
        %678 = vmatprep.mubr.f32.mxu0 0.0
        %679 = vmatmul.mubr.f32.gmra.mrb[0].mxu0 %v555
        %v680 = vpop.f32.mrb[0].mxu0
        %v681 = vadd.f32 %v533, %v680
        %v682 = vpop.f32.mrb[0].mxu0
        %683 = vmatprep.mubr.f32.mxu0 0.0
        %684 = vmatmul.mubr.f32.gmra.mrb[0].mxu0 %v558
        %v685 = vpop.f32.mrb[0].mxu0
        %v686 = vadd.f32 %v533, %v685
        %v687 = vpop.f32.mrb[0].mxu0
        %688 = vmatprep.mubr.f32.mxu0 0.0
        %689 = vmatmul.mubr.f32.gmra.mrb[0].mxu0 %v561
        %v690 = vpop.f32.mrb[0].mxu0
        %v691 = vadd.f32 %v533, %v690
        %v692 = vpop.f32.mrb[0].mxu0
        %693 = vmatprep.mubr.f32.mxu0 0.0
        %694 = vmatmul.mubr.f32.gmra.mrb[0].mxu0 %v564
        %v695 = vpop.f32.mrb[0].mxu0
        %v696 = vadd.f32 %v533, %v695
        %v697 = vpop.f32.mrb[0].mxu0
        %698 = vmatprep.mubr.f32.mxu0 0.0
        %699 = vmatmul.mubr.f32.gmra.mrb[0].mxu0 %v567
        %v700 = vpop.f32.mrb[0].mxu0
        %v701 = vadd.f32 %v533, %v700
        %v702 = vpop.f32.mrb[0].mxu0
        %703 = vmatprep.mubr.f32.mxu0 0.0
        %704 = vmatmul.mubr.f32.gmra.mrb[0].mxu0 %v570
        %v705 = vpop.f32.mrb[0].mxu0
        %v706 = vadd.f32 %v533, %v705
        %v707 = vpop.f32.mrb[0].mxu0
        %708 = vmatprep.mubr.f32.mxu0 0.0
        %709 = vmatmul.mubr.f32.gmra.mrb[0].mxu0 %v573
        %v710 = vpop.f32.mrb[0].mxu0
        %v711 = vadd.f32 %v533, %v710
        %v712 = vpop.f32.mrb[0].mxu0
        %713 = vmatprep.mubr.f32.mxu0 0.0
        %714 = vmatmul.mubr.f32.gmra.mrb[0].mxu0 %v576
        %v715 = vpop.f32.mrb[0].mxu0
        %v716 = vadd.f32 %v533, %v715
        %v717 = vpop.f32.mrb[0].mxu0
        %718 = vmatprep.mubr.f32.mxu0 0.0
        %719 = vmatmul.mubr.f32.gmra.mrb[0].mxu0 %v579
        %v720 = vpop.f32.mrb[0].mxu0
        %v721 = vadd.f32 %v533, %v720
        %v722 = vpop.f32.mrb[0].mxu0
        %723 = vmatprep.mubr.f32.mxu0 0.0
        %724 = vmatmul.mubr.f32.gmra.mrb[0].mxu0 %v582
        %v725 = vpop.f32.mrb[0].mxu0
        %v726 = vadd.f32 %v533, %v725
        %v727 = vpop.f32.mrb[0].mxu0
        %728 = vdwg.mxu0
        %v729 = vld [vmem:[%s6] sm:$0xff]
        %v730 = vld [vmem:[%s6 + $0x8] sm:$0xff]
        %v731 = vld [vmem:[%s6 + $0x10] sm:$0xff]
        %v732 = vld [vmem:[%s6 + $0x18] sm:$0xff]
        %v733 = vld [vmem:[%s6 + $0x20] sm:$0xff]
        %v734 = vld [vmem:[%s6 + $0x28] sm:$0xff]
        %v735 = vld [vmem:[%s6 + $0x30] sm:$0xff]
        %v736 = vld [vmem:[%s6 + $0x38] sm:$0xff]
        %v737 = vld [vmem:[%s7] sm:$0x1]
        %v739 = vlaneseq
        %v740 = vshrl.u32 %v739, 7
        %v741 = vsub.s32 0, %v740
        %v742 = vrot.slane %v737, %v741
        %744 = vmatprep.subr.mxu0 0.0
        %745 = vmatpush1.msra.mxu0 %v729
        %746 = vmatprep.subr.mxu0 0.0
        %747 = vmatpush1.msra.mxu0 %v730
        %748 = vmatprep.subr.mxu0 0.0
        %749 = vmatpush1.msra.mxu0 %v731
        %750 = vmatprep.subr.mxu0 0.0
        %751 = vmatpush1.msra.mxu0 %v732
        %752 = vmatprep.subr.mxu0 0.0
        %753 = vmatpush1.msra.mxu0 %v733
        %754 = vmatprep.subr.mxu0 0.0
        %755 = vmatpush1.msra.mxu0 %v734
        %756 = vmatprep.subr.mxu0 0.0
        %757 = vmatpush1.msra.mxu0 %v735
        %758 = vmatprep.subr.mxu0 0.0
        %759 = vmatpush1.msra.mxu0 %v736
        %760 = vmatprep.subr.mxu0 0.0
        %761 = vmatpush1.msra.mxu0 0.0
        %762 = vmatprep.subr.mxu0 0.0
        %763 = vmatpush1.msra.mxu0 0.0
        %764 = vmatprep.subr.mxu0 0.0
        %765 = vmatpush1.msra.mxu0 0.0
        %766 = vmatprep.subr.mxu0 0.0
        %767 = vmatpush1.msra.mxu0 0.0
        %768 = vmatprep.subr.mxu0 0.0
        %769 = vmatpush1.msra.mxu0 0.0
        %770 = vmatprep.subr.mxu0 0.0
        %771 = vmatpush1.msra.mxu0 0.0
        %772 = vmatprep.subr.mxu0 0.0
        %773 = vmatpush1.msra.mxu0 0.0
        %774 = vmatprep.subr.mxu0 0.0
        %775 = vmatpush1.msra.mxu0 0.0
        %776 = vmatprep.subr.mxu0 0.0
        %777 = vmatpush1.msra.mxu0 0.0
        %778 = vmatprep.subr.mxu0 0.0
        %779 = vmatpush1.msra.mxu0 0.0
        %780 = vmatprep.subr.mxu0 0.0
        %781 = vmatpush1.msra.mxu0 0.0
        %782 = vmatprep.subr.mxu0 0.0
        %783 = vmatpush1.msra.mxu0 0.0
        %784 = vmatprep.subr.mxu0 0.0
        %785 = vmatpush1.msra.mxu0 0.0
        %786 = vmatprep.subr.mxu0 0.0
        %787 = vmatpush1.msra.mxu0 0.0
        %788 = vmatprep.subr.mxu0 0.0
        %789 = vmatpush1.msra.mxu0 0.0
        %790 = vmatprep.subr.mxu0 0.0
        %791 = vmatpush1.msra.mxu0 0.0
        %792 = vmatprep.subr.mxu0 0.0
        %793 = vmatpush1.msra.mxu0 0.0
        %794 = vmatprep.subr.mxu0 0.0
        %795 = vmatpush1.msra.mxu0 0.0
        %796 = vmatprep.subr.mxu0 0.0
        %797 = vmatpush1.msra.mxu0 0.0
        %798 = vmatprep.subr.mxu0 0.0
        %799 = vmatpush1.msra.mxu0 0.0
        %800 = vmatprep.subr.mxu0 0.0
        %801 = vmatpush1.msra.mxu0 0.0
        %802 = vmatprep.subr.mxu0 0.0
        %803 = vmatpush1.msra.mxu0 0.0
        %804 = vmatprep.subr.mxu0 0.0
        %805 = vmatpush1.msra.mxu0 0.0
        %806 = vmatprep.subr.mxu0 0.0
        %807 = vmatpush1.msra.mxu0 0.0
        %808 = vmatprep.mubr.f32.mxu0 0.0
        %809 = vmatmul.mubr.f32.gmra.mrb[0].mxu0 %v537
        %v810 = vpop.f32.mrb[0].mxu0
        %v811 = vadd.f32 %v742, %v810
        %v812 = vpop.f32.mrb[0].mxu0
        %813 = vmatprep.mubr.f32.mxu0 0.0
        %814 = vmatmul.mubr.f32.gmra.mrb[0].mxu0 %v540
        %v815 = vpop.f32.mrb[0].mxu0
        %v816 = vadd.f32 %v742, %v815
        %v817 = vpop.f32.mrb[0].mxu0
        %818 = vmatprep.mubr.f32.mxu0 0.0
        %819 = vmatmul.mubr.f32.gmra.mrb[0].mxu0 %v543
        %v820 = vpop.f32.mrb[0].mxu0
        %v821 = vadd.f32 %v742, %v820
        %v822 = vpop.f32.mrb[0].mxu0
        %823 = vmatprep.mubr.f32.mxu0 0.0
        %824 = vmatmul.mubr.f32.gmra.mrb[0].mxu0 %v546
        %v825 = vpop.f32.mrb[0].mxu0
        %v826 = vadd.f32 %v742, %v825
        %v827 = vpop.f32.mrb[0].mxu0
        %828 = vmatprep.mubr.f32.mxu0 0.0
        %829 = vmatmul.mubr.f32.gmra.mrb[0].mxu0 %v549
        %v830 = vpop.f32.mrb[0].mxu0
        %v831 = vadd.f32 %v742, %v830
        %v832 = vpop.f32.mrb[0].mxu0
        %833 = vmatprep.mubr.f32.mxu0 0.0
        %834 = vmatmul.mubr.f32.gmra.mrb[0].mxu0 %v552
        %v835 = vpop.f32.mrb[0].mxu0
        %v836 = vadd.f32 %v742, %v835
        %v837 = vpop.f32.mrb[0].mxu0
        %838 = vmatprep.mubr.f32.mxu0 0.0
        %839 = vmatmul.mubr.f32.gmra.mrb[0].mxu0 %v555
        %v840 = vpop.f32.mrb[0].mxu0
        %v841 = vadd.f32 %v742, %v840
        %v842 = vpop.f32.mrb[0].mxu0
        %843 = vmatprep.mubr.f32.mxu0 0.0
        %844 = vmatmul.mubr.f32.gmra.mrb[0].mxu0 %v558
        %v845 = vpop.f32.mrb[0].mxu0
        %v846 = vadd.f32 %v742, %v845
        %v847 = vpop.f32.mrb[0].mxu0
        %848 = vmatprep.mubr.f32.mxu0 0.0
        %849 = vmatmul.mubr.f32.gmra.mrb[0].mxu0 %v561
        %v850 = vpop.f32.mrb[0].mxu0
        %v851 = vadd.f32 %v742, %v850
        %v852 = vpop.f32.mrb[0].mxu0
        %853 = vmatprep.mubr.f32.mxu0 0.0
        %854 = vmatmul.mubr.f32.gmra.mrb[0].mxu0 %v564
        %v855 = vpop.f32.mrb[0].mxu0
        %v856 = vadd.f32 %v742, %v855
        %v857 = vpop.f32.mrb[0].mxu0
        %858 = vmatprep.mubr.f32.mxu0 0.0
        %859 = vmatmul.mubr.f32.gmra.mrb[0].mxu0 %v567
        %v860 = vpop.f32.mrb[0].mxu0
        %v861 = vadd.f32 %v742, %v860
        %v862 = vpop.f32.mrb[0].mxu0
        %863 = vmatprep.mubr.f32.mxu0 0.0
        %864 = vmatmul.mubr.f32.gmra.mrb[0].mxu0 %v570
        %v865 = vpop.f32.mrb[0].mxu0
        %v866 = vadd.f32 %v742, %v865
        %v867 = vpop.f32.mrb[0].mxu0
        %868 = vmatprep.mubr.f32.mxu0 0.0
        %869 = vmatmul.mubr.f32.gmra.mrb[0].mxu0 %v573
        %v870 = vpop.f32.mrb[0].mxu0
        %v871 = vadd.f32 %v742, %v870
        %v872 = vpop.f32.mrb[0].mxu0
        %873 = vmatprep.mubr.f32.mxu0 0.0
        %874 = vmatmul.mubr.f32.gmra.mrb[0].mxu0 %v576
        %v875 = vpop.f32.mrb[0].mxu0
        %v876 = vadd.f32 %v742, %v875
        %v877 = vpop.f32.mrb[0].mxu0
        %878 = vmatprep.mubr.f32.mxu0 0.0
        %879 = vmatmul.mubr.f32.gmra.mrb[0].mxu0 %v579
        %v880 = vpop.f32.mrb[0].mxu0
        %v881 = vadd.f32 %v742, %v880
        %v882 = vpop.f32.mrb[0].mxu0
        %883 = vmatprep.mubr.f32.mxu0 0.0
        %884 = vmatmul.mubr.f32.gmra.mrb[0].mxu0 %v582
        %v885 = vpop.f32.mrb[0].mxu0
        %v886 = vadd.f32 %v742, %v885
        %v887 = vpop.f32.mrb[0].mxu0
        %888 = vdwg.mxu0
        %v889 = vlaneseq
        %v890 = vand.u32 %v889, 127
        %vm891 = vcmp.lt.s32.totalorder %v890, 8
        %v892 = vsel %vm891, 0.0, -1e+30
        %vm893 = vcmask 64512
        %v895 = vsel %vm893, %v512, 0
        %v898 = vsel %vm893, %v517, 0
        %v901 = vsel %vm893, %v651, 0
        %v904 = vsel %vm893, %v656, 0
        %v907 = vsel %vm893, %v661, 0
        %v910 = vsel %vm893, %v666, 0
        %v913 = vsel %vm893, %v671, 0
        %v916 = vsel %vm893, %v676, 0
        %v919 = vsel %vm893, %v681, 0
        %v922 = vsel %vm893, %v686, 0
        %v925 = vsel %vm893, %v691, 0
        %v928 = vsel %vm893, %v696, 0
        %v931 = vsel %vm893, %v701, 0
        %v934 = vsel %vm893, %v706, 0
        %v937 = vsel %vm893, %v711, 0
        %v940 = vsel %vm893, %v716, 0
        %v943 = vsel %vm893, %v721, 0
        %v946 = vsel %vm893, %v726, 0
        %948 = vmatprep.subr.mxu0 0.0
        %949 = vmatpush1.xpose.msra.mxu0 %v901
        %950 = vmatprep.subr.mxu0 0.0
        %951 = vmatpush1.xpose.msra.mxu0 %v904
        %952 = vmatprep.subr.mxu0 0.0
        %953 = vmatpush1.xpose.msra.mxu0 %v907
        %954 = vmatprep.subr.mxu0 0.0
        %955 = vmatpush1.xpose.msra.mxu0 %v910
        %956 = vmatprep.subr.mxu0 0.0
        %957 = vmatpush1.xpose.msra.mxu0 %v913
        %958 = vmatprep.subr.mxu0 0.0
        %959 = vmatpush1.xpose.msra.mxu0 %v916
        %960 = vmatprep.subr.mxu0 0.0
        %961 = vmatpush1.xpose.msra.mxu0 %v919
        %962 = vmatprep.subr.mxu0 0.0
        %963 = vmatpush1.xpose.msra.mxu0 %v922
        %964 = vmatprep.subr.mxu0 0.0
        %965 = vmatpush1.xpose.msra.mxu0 %v925
        %966 = vmatprep.subr.mxu0 0.0
        %967 = vmatpush1.xpose.msra.mxu0 %v928
        %968 = vmatprep.subr.mxu0 0.0
        %969 = vmatpush1.xpose.msra.mxu0 %v931
        %970 = vmatprep.subr.mxu0 0.0
        %971 = vmatpush1.xpose.msra.mxu0 %v934
        %972 = vmatprep.subr.mxu0 0.0
        %973 = vmatpush1.xpose.msra.mxu0 %v937
        %974 = vmatprep.subr.mxu0 0.0
        %975 = vmatpush1.xpose.msra.mxu0 %v940
        %976 = vmatprep.subr.mxu0 0.0
        %977 = vmatpush1.xpose.msra.mxu0 %v943
        %978 = vmatprep.subr.mxu0 0.0
        %979 = vmatpush1.xpose.msra.mxu0 %v946
        %980 = vmatprep.subr.mxu0 0.0
        %981 = vmatpush1.xpose.msra.mxu0 0.0
        %982 = vmatprep.subr.mxu0 0.0
        %983 = vmatpush1.xpose.msra.mxu0 0.0
        %984 = vmatprep.subr.mxu0 0.0
        %985 = vmatpush1.xpose.msra.mxu0 0.0
        %986 = vmatprep.subr.mxu0 0.0
        %987 = vmatpush1.xpose.msra.mxu0 0.0
        %988 = vmatprep.subr.mxu0 0.0
        %989 = vmatpush1.xpose.msra.mxu0 0.0
        %990 = vmatprep.subr.mxu0 0.0
        %991 = vmatpush1.xpose.msra.mxu0 0.0
        %992 = vmatprep.subr.mxu0 0.0
        %993 = vmatpush1.xpose.msra.mxu0 0.0
        %994 = vmatprep.subr.mxu0 0.0
        %995 = vmatpush1.xpose.msra.mxu0 0.0
        %996 = vmatprep.subr.mxu0 0.0
        %997 = vmatpush1.xpose.msra.mxu0 0.0
        %998 = vmatprep.subr.mxu0 0.0
        %999 = vmatpush1.xpose.msra.mxu0 0.0
        %1000 = vmatprep.subr.mxu0 0.0
        %1001 = vmatpush1.xpose.msra.mxu0 0.0
        %1002 = vmatprep.subr.mxu0 0.0
        %1003 = vmatpush1.xpose.msra.mxu0 0.0
        %1004 = vmatprep.subr.mxu0 0.0
        %1005 = vmatpush1.xpose.msra.mxu0 0.0
        %1006 = vmatprep.subr.mxu0 0.0
        %1007 = vmatpush1.xpose.msra.mxu0 0.0
        %1008 = vmatprep.subr.mxu0 0.0
        %1009 = vmatpush1.xpose.msra.mxu0 0.0
        %1010 = vmatprep.subr.mxu0 0.0
        %1011 = vmatpush1.xpose.msra.mxu0 0.0
        %1012 = vmatprep.mubr.f32.mxu0 0.0
        %1013 = vmatmul.mubr.f32.gmra.mrb[0].mxu0 %v895
        %v1014 = vpop.f32.mrb[0].mxu0
        %v1015 = vadd.f32 %v892, %v1014
        %v1016 = vpop.f32.mrb[0].mxu0
        %1017 = vmatprep.mubr.f32.mxu0 0.0
        %1018 = vmatmul.mubr.f32.gmra.mrb[0].mxu0 %v898
        %v1019 = vpop.f32.mrb[0].mxu0
        %v1020 = vadd.f32 %v892, %v1019
        %v1021 = vpop.f32.mrb[0].mxu0
        %1022 = vdwg.mxu0
        %1023 = vmax.xlane.f32.xlu0 %v1015
        %v1024 = vpop.xlane.xlu0 %1023
        %1025 = vmax.xlane.f32.xlu0 %v1020
        %v1026 = vpop.xlane.xlu0 %1025
        %v1027 = vsub.f32 %v1015, %v1024
        %v1028 = vsub.f32 %v1020, %v1026
        %v1029 = vmul.f32 %v1027, 1.442695
        %v1030 = vpow.pop %v1029
        %v1031 = vmul.f32 %v1028, 1.442695
        %v1032 = vpow.pop %v1031
        %1033 = vadd.xlane.f32.xlu0 %v1030
        %v1034 = vpop.xlane.xlu0 %1033
        %1035 = vadd.xlane.f32.xlu0 %v1032
        %v1036 = vpop.xlane.xlu0 %1035
        %v1037 = vrcp.pop %v1034
        %v1038 = vrcp.pop %v1036
        %1039 = vmatprep.subr.mxu0 0.0
        %1040 = vmatpush1.msra.mxu0 %v811
        %1041 = vmatprep.subr.mxu0 0.0
        %1042 = vmatpush1.msra.mxu0 %v816
        %1043 = vmatprep.subr.mxu0 0.0
        %1044 = vmatpush1.msra.mxu0 %v821
        %1045 = vmatprep.subr.mxu0 0.0
        %1046 = vmatpush1.msra.mxu0 %v826
        %1047 = vmatprep.subr.mxu0 0.0
        %1048 = vmatpush1.msra.mxu0 %v831
        %1049 = vmatprep.subr.mxu0 0.0
        %1050 = vmatpush1.msra.mxu0 %v836
        %1051 = vmatprep.subr.mxu0 0.0
        %1052 = vmatpush1.msra.mxu0 %v841
        %1053 = vmatprep.subr.mxu0 0.0
        %1054 = vmatpush1.msra.mxu0 %v846
        %1055 = vmatprep.subr.mxu0 0.0
        %1056 = vmatpush1.msra.mxu0 %v851
        %1057 = vmatprep.subr.mxu0 0.0
        %1058 = vmatpush1.msra.mxu0 %v856
        %1059 = vmatprep.subr.mxu0 0.0
        %1060 = vmatpush1.msra.mxu0 %v861
        %1061 = vmatprep.subr.mxu0 0.0
        %1062 = vmatpush1.msra.mxu0 %v866
        %1063 = vmatprep.subr.mxu0 0.0
        %1064 = vmatpush1.msra.mxu0 %v871
        %1065 = vmatprep.subr.mxu0 0.0
        %1066 = vmatpush1.msra.mxu0 %v876
        %1067 = vmatprep.subr.mxu0 0.0
        %1068 = vmatpush1.msra.mxu0 %v881
        %1069 = vmatprep.subr.mxu0 0.0
        %1070 = vmatpush1.msra.mxu0 %v886
        %1071 = vmatprep.subr.mxu0 0.0
        %1072 = vmatpush1.msra.mxu0 0.0
        %1073 = vmatprep.subr.mxu0 0.0
        %1074 = vmatpush1.msra.mxu0 0.0
        %1075 = vmatprep.subr.mxu0 0.0
        %1076 = vmatpush1.msra.mxu0 0.0
        %1077 = vmatprep.subr.mxu0 0.0
        %1078 = vmatpush1.msra.mxu0 0.0
        %1079 = vmatprep.subr.mxu0 0.0
        %1080 = vmatpush1.msra.mxu0 0.0
        %1081 = vmatprep.subr.mxu0 0.0
        %1082 = vmatpush1.msra.mxu0 0.0
        %1083 = vmatprep.subr.mxu0 0.0
        %1084 = vmatpush1.msra.mxu0 0.0
        %1085 = vmatprep.subr.mxu0 0.0
        %1086 = vmatpush1.msra.mxu0 0.0
        %1087 = vmatprep.subr.mxu0 0.0
        %1088 = vmatpush1.msra.mxu0 0.0
        %1089 = vmatprep.subr.mxu0 0.0
        %1090 = vmatpush1.msra.mxu0 0.0
        %1091 = vmatprep.subr.mxu0 0.0
        %1092 = vmatpush1.msra.mxu0 0.0
        %1093 = vmatprep.subr.mxu0 0.0
        %1094 = vmatpush1.msra.mxu0 0.0
        %1095 = vmatprep.subr.mxu0 0.0
        %1096 = vmatpush1.msra.mxu0 0.0
        %1097 = vmatprep.subr.mxu0 0.0
        %1098 = vmatpush1.msra.mxu0 0.0
        %1099 = vmatprep.subr.mxu0 0.0
        %1100 = vmatpush1.msra.mxu0 0.0
        %1101 = vmatprep.subr.mxu0 0.0
        %1102 = vmatpush1.msra.mxu0 0.0
        %1103 = vmatprep.mubr.f32.mxu0 0.0
        %1104 = vmatmul.mubr.f32.gmra.mrb[0].mxu0 %v1030
        %v1105 = vpop.f32.mrb[0].mxu0
        %v1106 = vadd.f32 0.0, %v1105
        %v1107 = vpop.f32.mrb[0].mxu0
        %1108 = vmatprep.mubr.f32.mxu0 0.0
        %1109 = vmatmul.mubr.f32.gmra.mrb[0].mxu0 %v1032
        %v1110 = vpop.f32.mrb[0].mxu0
        %v1111 = vadd.f32 0.0, %v1110
        %v1112 = vpop.f32.mrb[0].mxu0
        %1113 = vdwg.mxu0
        %v1114 = vmul.f32 %v1106, %v1037
        %v1115 = vmul.f32 %v1111, %v1038
        %v1116 = vld [vmem:[%s8] sm:$0xff]
        %1117 = vrot.lane.b32.xlu0 %v512, 120
        %v1118 = vpop.permute.xlu0 %1117
        %1119 = vrot.lane.b32.xlu0 %v517, 120
        %v1120 = vpop.permute.xlu0 %1119
        %1121 = vrot.lane.b32.xlu0 %v651, 120
        %v1122 = vpop.permute.xlu0 %1121
        %1123 = vrot.lane.b32.xlu0 %v656, 120
        %v1124 = vpop.permute.xlu0 %1123
        %1125 = vrot.lane.b32.xlu0 %v661, 120
        %v1126 = vpop.permute.xlu0 %1125
        %1127 = vrot.lane.b32.xlu0 %v666, 120
        %v1128 = vpop.permute.xlu0 %1127
        %1129 = vrot.lane.b32.xlu0 %v671, 120
        %v1130 = vpop.permute.xlu0 %1129
        %1131 = vrot.lane.b32.xlu0 %v676, 120
        %v1132 = vpop.permute.xlu0 %1131
        %1133 = vrot.lane.b32.xlu0 %v681, 120
        %v1134 = vpop.permute.xlu0 %1133
        %1135 = vrot.lane.b32.xlu0 %v686, 120
        %v1136 = vpop.permute.xlu0 %1135
        %1137 = vrot.lane.b32.xlu0 %v691, 120
        %v1138 = vpop.permute.xlu0 %1137
        %1139 = vrot.lane.b32.xlu0 %v696, 120
        %v1140 = vpop.permute.xlu0 %1139
        %1141 = vrot.lane.b32.xlu0 %v701, 120
        %v1142 = vpop.permute.xlu0 %1141
        %1143 = vrot.lane.b32.xlu0 %v706, 120
        %v1144 = vpop.permute.xlu0 %1143
        %1145 = vrot.lane.b32.xlu0 %v711, 120
        %v1146 = vpop.permute.xlu0 %1145
        %1147 = vrot.lane.b32.xlu0 %v716, 120
        %v1148 = vpop.permute.xlu0 %1147
        %1149 = vrot.lane.b32.xlu0 %v721, 120
        %v1150 = vpop.permute.xlu0 %1149
        %1151 = vrot.lane.b32.xlu0 %v726, 120
        %v1152 = vpop.permute.xlu0 %1151
        %v1153 = vsel %vm893, %v1118, 0
        %v1155 = vsel %vm893, %v1120, 0
        %v1157 = vsel %vm893, %v1122, 0
        %v1159 = vsel %vm893, %v1124, 0
        %v1161 = vsel %vm893, %v1126, 0
        %v1163 = vsel %vm893, %v1128, 0
        %v1165 = vsel %vm893, %v1130, 0
        %v1167 = vsel %vm893, %v1132, 0
        %v1169 = vsel %vm893, %v1134, 0
        %v1171 = vsel %vm893, %v1136, 0
        %v1173 = vsel %vm893, %v1138, 0
        %v1175 = vsel %vm893, %v1140, 0
        %v1177 = vsel %vm893, %v1142, 0
        %v1179 = vsel %vm893, %v1144, 0
        %v1181 = vsel %vm893, %v1146, 0
        %v1183 = vsel %vm893, %v1148, 0
        %v1185 = vsel %vm893, %v1150, 0
        %v1187 = vsel %vm893, %v1152, 0
        %1189 = vmatprep.subr.mxu0 0.0
        %1190 = vmatpush1.xpose.msra.mxu0 %v1157
        %1191 = vmatprep.subr.mxu0 0.0
        %1192 = vmatpush1.xpose.msra.mxu0 %v1159
        %1193 = vmatprep.subr.mxu0 0.0
        %1194 = vmatpush1.xpose.msra.mxu0 %v1161
        %1195 = vmatprep.subr.mxu0 0.0
        %1196 = vmatpush1.xpose.msra.mxu0 %v1163
        %1197 = vmatprep.subr.mxu0 0.0
        %1198 = vmatpush1.xpose.msra.mxu0 %v1165
        %1199 = vmatprep.subr.mxu0 0.0
        %1200 = vmatpush1.xpose.msra.mxu0 %v1167
        %1201 = vmatprep.subr.mxu0 0.0
        %1202 = vmatpush1.xpose.msra.mxu0 %v1169
        %1203 = vmatprep.subr.mxu0 0.0
        %1204 = vmatpush1.xpose.msra.mxu0 %v1171
        %1205 = vmatprep.subr.mxu0 0.0
        %1206 = vmatpush1.xpose.msra.mxu0 %v1173
        %1207 = vmatprep.subr.mxu0 0.0
        %1208 = vmatpush1.xpose.msra.mxu0 %v1175
        %1209 = vmatprep.subr.mxu0 0.0
        %1210 = vmatpush1.xpose.msra.mxu0 %v1177
        %1211 = vmatprep.subr.mxu0 0.0
        %1212 = vmatpush1.xpose.msra.mxu0 %v1179
        %1213 = vmatprep.subr.mxu0 0.0
        %1214 = vmatpush1.xpose.msra.mxu0 %v1181
        %1215 = vmatprep.subr.mxu0 0.0
        %1216 = vmatpush1.xpose.msra.mxu0 %v1183
        %1217 = vmatprep.subr.mxu0 0.0
        %1218 = vmatpush1.xpose.msra.mxu0 %v1185
        %1219 = vmatprep.subr.mxu0 0.0
        %1220 = vmatpush1.xpose.msra.mxu0 %v1187
        %1221 = vmatprep.subr.mxu0 0.0
        %1222 = vmatpush1.xpose.msra.mxu0 0.0
        %1223 = vmatprep.subr.mxu0 0.0
        %1224 = vmatpush1.xpose.msra.mxu0 0.0
        %1225 = vmatprep.subr.mxu0 0.0
        %1226 = vmatpush1.xpose.msra.mxu0 0.0
        %1227 = vmatprep.subr.mxu0 0.0
        %1228 = vmatpush1.xpose.msra.mxu0 0.0
        %1229 = vmatprep.subr.mxu0 0.0
        %1230 = vmatpush1.xpose.msra.mxu0 0.0
        %1231 = vmatprep.subr.mxu0 0.0
        %1232 = vmatpush1.xpose.msra.mxu0 0.0
        %1233 = vmatprep.subr.mxu0 0.0
        %1234 = vmatpush1.xpose.msra.mxu0 0.0
        %1235 = vmatprep.subr.mxu0 0.0
        %1236 = vmatpush1.xpose.msra.mxu0 0.0
        %1237 = vmatprep.subr.mxu0 0.0
        %1238 = vmatpush1.xpose.msra.mxu0 0.0
        %1239 = vmatprep.subr.mxu0 0.0
        %1240 = vmatpush1.xpose.msra.mxu0 0.0
        %1241 = vmatprep.subr.mxu0 0.0
        %1242 = vmatpush1.xpose.msra.mxu0 0.0
        %1243 = vmatprep.subr.mxu0 0.0
        %1244 = vmatpush1.xpose.msra.mxu0 0.0
        %1245 = vmatprep.subr.mxu0 0.0
        %1246 = vmatpush1.xpose.msra.mxu0 0.0
        %1247 = vmatprep.subr.mxu0 0.0
        %1248 = vmatpush1.xpose.msra.mxu0 0.0
        %1249 = vmatprep.subr.mxu0 0.0
        %1250 = vmatpush1.xpose.msra.mxu0 0.0
        %1251 = vmatprep.subr.mxu0 0.0
        %1252 = vmatpush1.xpose.msra.mxu0 0.0
        %1253 = vmatprep.mubr.f32.mxu0 0.0
        %1254 = vmatmul.mubr.f32.gmra.mrb[0].mxu0 %v1153
        %v1255 = vpop.f32.mrb[0].mxu0
        %v1256 = vadd.f32 %v892, %v1255
        %v1257 = vpop.f32.mrb[0].mxu0
        %1258 = vmatprep.mubr.f32.mxu0 0.0
        %1259 = vmatmul.mubr.f32.gmra.mrb[0].mxu0 %v1155
        %v1260 = vpop.f32.mrb[0].mxu0
        %v1261 = vadd.f32 %v892, %v1260
        %v1262 = vpop.f32.mrb[0].mxu0
        %1263 = vdwg.mxu0
        %1264 = vmax.xlane.f32.xlu0 %v1256
        %v1265 = vpop.xlane.xlu0 %1264
        %1266 = vmax.xlane.f32.xlu0 %v1261
        %v1267 = vpop.xlane.xlu0 %1266
        %v1268 = vsub.f32 %v1256, %v1265
        %v1269 = vsub.f32 %v1261, %v1267
        %v1270 = vmul.f32 %v1268, 1.442695
        %v1271 = vpow.pop %v1270
        %v1272 = vmul.f32 %v1269, 1.442695
        %v1273 = vpow.pop %v1272
        %1274 = vadd.xlane.f32.xlu0 %v1271
        %v1275 = vpop.xlane.xlu0 %1274
        %1276 = vadd.xlane.f32.xlu0 %v1273
        %v1277 = vpop.xlane.xlu0 %1276
        %v1278 = vrcp.pop %v1275
        %v1279 = vrcp.pop %v1277
        %1296 = vrot.lane.b32.xlu0 %v811, 120
        %v1297 = vpop.permute.xlu0 %1296
        %1298 = vrot.lane.b32.xlu0 %v816, 120
        %v1299 = vpop.permute.xlu0 %1298
        %1300 = vrot.lane.b32.xlu0 %v821, 120
        %v1301 = vpop.permute.xlu0 %1300
        %1302 = vrot.lane.b32.xlu0 %v826, 120
        %v1303 = vpop.permute.xlu0 %1302
        %1304 = vrot.lane.b32.xlu0 %v831, 120
        %v1305 = vpop.permute.xlu0 %1304
        %1306 = vrot.lane.b32.xlu0 %v836, 120
        %v1307 = vpop.permute.xlu0 %1306
        %1308 = vrot.lane.b32.xlu0 %v841, 120
        %v1309 = vpop.permute.xlu0 %1308
        %1310 = vrot.lane.b32.xlu0 %v846, 120
        %v1311 = vpop.permute.xlu0 %1310
        %1312 = vrot.lane.b32.xlu0 %v851, 120
        %v1313 = vpop.permute.xlu0 %1312
        %1314 = vrot.lane.b32.xlu0 %v856, 120
        %v1315 = vpop.permute.xlu0 %1314
        %1316 = vrot.lane.b32.xlu0 %v861, 120
        %v1317 = vpop.permute.xlu0 %1316
        %1318 = vrot.lane.b32.xlu0 %v866, 120
        %v1319 = vpop.permute.xlu0 %1318
        %1320 = vrot.lane.b32.xlu0 %v871, 120
        %v1321 = vpop.permute.xlu0 %1320
        %1322 = vrot.lane.b32.xlu0 %v876, 120
        %v1323 = vpop.permute.xlu0 %1322
        %1324 = vrot.lane.b32.xlu0 %v881, 120
        %v1325 = vpop.permute.xlu0 %1324
        %1326 = vrot.lane.b32.xlu0 %v886, 120
        %v1327 = vpop.permute.xlu0 %1326
        %1344 = vmatprep.subr.mxu0 0.0
        %1345 = vmatpush1.msra.mxu0 %v1297
        %1346 = vmatprep.subr.mxu0 0.0
        %1347 = vmatpush1.msra.mxu0 %v1299
        %1348 = vmatprep.subr.mxu0 0.0
        %1349 = vmatpush1.msra.mxu0 %v1301
        %1350 = vmatprep.subr.mxu0 0.0
        %1351 = vmatpush1.msra.mxu0 %v1303
        %1352 = vmatprep.subr.mxu0 0.0
        %1353 = vmatpush1.msra.mxu0 %v1305
        %1354 = vmatprep.subr.mxu0 0.0
        %1355 = vmatpush1.msra.mxu0 %v1307
        %1356 = vmatprep.subr.mxu0 0.0
        %1357 = vmatpush1.msra.mxu0 %v1309
        %1358 = vmatprep.subr.mxu0 0.0
        %1359 = vmatpush1.msra.mxu0 %v1311
        %1360 = vmatprep.subr.mxu0 0.0
        %1361 = vmatpush1.msra.mxu0 %v1313
        %1362 = vmatprep.subr.mxu0 0.0
        %1363 = vmatpush1.msra.mxu0 %v1315
        %1364 = vmatprep.subr.mxu0 0.0
        %1365 = vmatpush1.msra.mxu0 %v1317
        %1366 = vmatprep.subr.mxu0 0.0
        %1367 = vmatpush1.msra.mxu0 %v1319
        %1368 = vmatprep.subr.mxu0 0.0
        %1369 = vmatpush1.msra.mxu0 %v1321
        %1370 = vmatprep.subr.mxu0 0.0
        %1371 = vmatpush1.msra.mxu0 %v1323
        %1372 = vmatprep.subr.mxu0 0.0
        %1373 = vmatpush1.msra.mxu0 %v1325
        %1374 = vmatprep.subr.mxu0 0.0
        %1375 = vmatpush1.msra.mxu0 %v1327
        %1376 = vmatprep.subr.mxu0 0.0
        %1377 = vmatpush1.msra.mxu0 0.0
        %1378 = vmatprep.subr.mxu0 0.0
        %1379 = vmatpush1.msra.mxu0 0.0
        %1380 = vmatprep.subr.mxu0 0.0
        %1381 = vmatpush1.msra.mxu0 0.0
        %1382 = vmatprep.subr.mxu0 0.0
        %1383 = vmatpush1.msra.mxu0 0.0
        %1384 = vmatprep.subr.mxu0 0.0
        %1385 = vmatpush1.msra.mxu0 0.0
        %1386 = vmatprep.subr.mxu0 0.0
        %1387 = vmatpush1.msra.mxu0 0.0
        %1388 = vmatprep.subr.mxu0 0.0
        %1389 = vmatpush1.msra.mxu0 0.0
        %1390 = vmatprep.subr.mxu0 0.0
        %1391 = vmatpush1.msra.mxu0 0.0
        %1392 = vmatprep.subr.mxu0 0.0
        %1393 = vmatpush1.msra.mxu0 0.0
        %1394 = vmatprep.subr.mxu0 0.0
        %1395 = vmatpush1.msra.mxu0 0.0
        %1396 = vmatprep.subr.mxu0 0.0
        %1397 = vmatpush1.msra.mxu0 0.0
        %1398 = vmatprep.subr.mxu0 0.0
        %1399 = vmatpush1.msra.mxu0 0.0
        %1400 = vmatprep.subr.mxu0 0.0
        %1401 = vmatpush1.msra.mxu0 0.0
        %1402 = vmatprep.subr.mxu0 0.0
        %1403 = vmatpush1.msra.mxu0 0.0
        %1404 = vmatprep.subr.mxu0 0.0
        %1405 = vmatpush1.msra.mxu0 0.0
        %1406 = vmatprep.subr.mxu0 0.0
        %1407 = vmatpush1.msra.mxu0 0.0
        %1408 = vmatprep.mubr.f32.mxu0 0.0
        %1409 = vmatmul.mubr.f32.gmra.mrb[0].mxu0 %v1271
        %v1410 = vpop.f32.mrb[0].mxu0
        %v1411 = vadd.f32 0.0, %v1410
        %v1412 = vpop.f32.mrb[0].mxu0
        %1413 = vmatprep.mubr.f32.mxu0 0.0
        %1414 = vmatmul.mubr.f32.gmra.mrb[0].mxu0 %v1273
        %v1415 = vpop.f32.mrb[0].mxu0
        %v1416 = vadd.f32 0.0, %v1415
        %v1417 = vpop.f32.mrb[0].mxu0
        %1418 = vdwg.mxu0
        %v1419 = vmul.f32 %v1411, %v1278
        %v1420 = vmul.f32 %v1416, %v1279
        %v1421 = vld [vmem:[%s8 + $0x8] sm:$0xff]
        %v1423 = vsel %vm893, %v1419, 0
        %v1426 = vsel %vm893, %v1420, 0
        %1428 = vmatprep.subr.mxu0 0.0
        %1429 = vmatpush1.msra.mxu0 %v1421
        %1430 = vmatprep.subr.mxu0 0.0
        %1431 = vmatpush1.msra.mxu0 0.0
        %1432 = vmatprep.subr.mxu0 0.0
        %1433 = vmatpush1.msra.mxu0 0.0
        %1434 = vmatprep.subr.mxu0 0.0
        %1435 = vmatpush1.msra.mxu0 0.0
        %1436 = vmatprep.subr.mxu0 0.0
        %1437 = vmatpush1.msra.mxu0 0.0
        %1438 = vmatprep.subr.mxu0 0.0
        %1439 = vmatpush1.msra.mxu0 0.0
        %1440 = vmatprep.subr.mxu0 0.0
        %1441 = vmatpush1.msra.mxu0 0.0
        %1442 = vmatprep.subr.mxu0 0.0
        %1443 = vmatpush1.msra.mxu0 0.0
        %1444 = vmatprep.subr.mxu0 0.0
        %1445 = vmatpush1.msra.mxu0 0.0
        %1446 = vmatprep.subr.mxu0 0.0
        %1447 = vmatpush1.msra.mxu0 0.0
        %1448 = vmatprep.subr.mxu0 0.0
        %1449 = vmatpush1.msra.mxu0 0.0
        %1450 = vmatprep.subr.mxu0 0.0
        %1451 = vmatpush1.msra.mxu0 0.0
        %1452 = vmatprep.subr.mxu0 0.0
        %1453 = vmatpush1.msra.mxu0 0.0
        %1454 = vmatprep.subr.mxu0 0.0
        %1455 = vmatpush1.msra.mxu0 0.0
        %1456 = vmatprep.subr.mxu0 0.0
        %1457 = vmatpush1.msra.mxu0 0.0
        %1458 = vmatprep.subr.mxu0 0.0
        %1459 = vmatpush1.msra.mxu0 0.0
        %1460 = vmatprep.subr.mxu0 0.0
        %1461 = vmatpush1.msra.mxu0 0.0
        %1462 = vmatprep.subr.mxu0 0.0
        %1463 = vmatpush1.msra.mxu0 0.0
        %1464 = vmatprep.subr.mxu0 0.0
        %1465 = vmatpush1.msra.mxu0 0.0
        %1466 = vmatprep.subr.mxu0 0.0
        %1467 = vmatpush1.msra.mxu0 0.0
        %1468 = vmatprep.subr.mxu0 0.0
        %1469 = vmatpush1.msra.mxu0 0.0
        %1470 = vmatprep.subr.mxu0 0.0
        %1471 = vmatpush1.msra.mxu0 0.0
        %1472 = vmatprep.subr.mxu0 0.0
        %1473 = vmatpush1.msra.mxu0 0.0
        %1474 = vmatprep.subr.mxu0 0.0
        %1475 = vmatpush1.msra.mxu0 0.0
        %1476 = vmatprep.subr.mxu0 0.0
        %1477 = vmatpush1.msra.mxu0 0.0
        %1478 = vmatprep.subr.mxu0 0.0
        %1479 = vmatpush1.msra.mxu0 0.0
        %1480 = vmatprep.subr.mxu0 0.0
        %1481 = vmatpush1.msra.mxu0 0.0
        %1482 = vmatprep.subr.mxu0 0.0
        %1483 = vmatpush1.msra.mxu0 0.0
        %1484 = vmatprep.subr.mxu0 0.0
        %1485 = vmatpush1.msra.mxu0 0.0
        %1486 = vmatprep.subr.mxu0 0.0
        %1487 = vmatpush1.msra.mxu0 0.0
        %1488 = vmatprep.subr.mxu0 0.0
        %1489 = vmatpush1.msra.mxu0 0.0
        %1490 = vmatprep.subr.mxu0 0.0
        %1491 = vmatpush1.msra.mxu0 0.0
        %1492 = vmatprep.mubr.f32.mxu0 0.0
        %1493 = vmatmul.mubr.f32.gmra.mrb[0].mxu0 %v1423
        %v1494 = vpop.f32.mrb[0].mxu0
        %v1495 = vadd.f32 0.0, %v1494
        %v1496 = vpop.f32.mrb[0].mxu0
        %1497 = vmatprep.mubr.f32.mxu0 0.0
        %1498 = vmatmul.mubr.f32.gmra.mrb[0].mxu0 %v1426
        %v1499 = vpop.f32.mrb[0].mxu0
        %v1500 = vadd.f32 0.0, %v1499
        %v1501 = vpop.f32.mrb[0].mxu0
        %1502 = vdwg.mxu0
        %v1504 = vsel %vm893, %v1114, 0
        %v1507 = vsel %vm893, %v1115, 0
        %1509 = vmatprep.subr.mxu0 0.0
        %1510 = vmatpush1.msra.mxu0 %v1116
        %1511 = vmatprep.subr.mxu0 0.0
        %1512 = vmatpush1.msra.mxu0 0.0
        %1513 = vmatprep.subr.mxu0 0.0
        %1514 = vmatpush1.msra.mxu0 0.0
        %1515 = vmatprep.subr.mxu0 0.0
        %1516 = vmatpush1.msra.mxu0 0.0
        %1517 = vmatprep.subr.mxu0 0.0
        %1518 = vmatpush1.msra.mxu0 0.0
        %1519 = vmatprep.subr.mxu0 0.0
        %1520 = vmatpush1.msra.mxu0 0.0
        %1521 = vmatprep.subr.mxu0 0.0
        %1522 = vmatpush1.msra.mxu0 0.0
        %1523 = vmatprep.subr.mxu0 0.0
        %1524 = vmatpush1.msra.mxu0 0.0
        %1525 = vmatprep.subr.mxu0 0.0
        %1526 = vmatpush1.msra.mxu0 0.0
        %1527 = vmatprep.subr.mxu0 0.0
        %1528 = vmatpush1.msra.mxu0 0.0
        %1529 = vmatprep.subr.mxu0 0.0
        %1530 = vmatpush1.msra.mxu0 0.0
        %1531 = vmatprep.subr.mxu0 0.0
        %1532 = vmatpush1.msra.mxu0 0.0
        %1533 = vmatprep.subr.mxu0 0.0
        %1534 = vmatpush1.msra.mxu0 0.0
        %1535 = vmatprep.subr.mxu0 0.0
        %1536 = vmatpush1.msra.mxu0 0.0
        %1537 = vmatprep.subr.mxu0 0.0
        %1538 = vmatpush1.msra.mxu0 0.0
        %1539 = vmatprep.subr.mxu0 0.0
        %1540 = vmatpush1.msra.mxu0 0.0
        %1541 = vmatprep.subr.mxu0 0.0
        %1542 = vmatpush1.msra.mxu0 0.0
        %1543 = vmatprep.subr.mxu0 0.0
        %1544 = vmatpush1.msra.mxu0 0.0
        %1545 = vmatprep.subr.mxu0 0.0
        %1546 = vmatpush1.msra.mxu0 0.0
        %1547 = vmatprep.subr.mxu0 0.0
        %1548 = vmatpush1.msra.mxu0 0.0
        %1549 = vmatprep.subr.mxu0 0.0
        %1550 = vmatpush1.msra.mxu0 0.0
        %1551 = vmatprep.subr.mxu0 0.0
        %1552 = vmatpush1.msra.mxu0 0.0
        %1553 = vmatprep.subr.mxu0 0.0
        %1554 = vmatpush1.msra.mxu0 0.0
        %1555 = vmatprep.subr.mxu0 0.0
        %1556 = vmatpush1.msra.mxu0 0.0
        %1557 = vmatprep.subr.mxu0 0.0
        %1558 = vmatpush1.msra.mxu0 0.0
        %1559 = vmatprep.subr.mxu0 0.0
        %1560 = vmatpush1.msra.mxu0 0.0
        %1561 = vmatprep.subr.mxu0 0.0
        %1562 = vmatpush1.msra.mxu0 0.0
        %1563 = vmatprep.subr.mxu0 0.0
        %1564 = vmatpush1.msra.mxu0 0.0
        %1565 = vmatprep.subr.mxu0 0.0
        %1566 = vmatpush1.msra.mxu0 0.0
        %1567 = vmatprep.subr.mxu0 0.0
        %1568 = vmatpush1.msra.mxu0 0.0
        %1569 = vmatprep.subr.mxu0 0.0
        %1570 = vmatpush1.msra.mxu0 0.0
        %1571 = vmatprep.subr.mxu0 0.0
        %1572 = vmatpush1.msra.mxu0 0.0
        %1573 = vmatprep.mubr.f32.mxu0 0.0
        %1574 = vmatmul.mubr.f32.gmra.mrb[0].mxu0 %v1504
        %v1575 = vpop.f32.mrb[0].mxu0
        %v1576 = vadd.f32 %v1495, %v1575
        %v1577 = vpop.f32.mrb[0].mxu0
        %1578 = vmatprep.mubr.f32.mxu0 0.0
        %1579 = vmatmul.mubr.f32.gmra.mrb[0].mxu0 %v1507
        %v1580 = vpop.f32.mrb[0].mxu0
        %v1581 = vadd.f32 %v1500, %v1580
        %v1582 = vpop.f32.mrb[0].mxu0
        %1583 = vdwg.mxu0
        %1584 = vrot.lane.b32.xlu0 %v512, 112
        %v1585 = vpop.permute.xlu0 %1584
        %1586 = vrot.lane.b32.xlu0 %v517, 112
        %v1587 = vpop.permute.xlu0 %1586
        %1588 = vrot.lane.b32.xlu0 %v651, 112
        %v1589 = vpop.permute.xlu0 %1588
        %1590 = vrot.lane.b32.xlu0 %v656, 112
        %v1591 = vpop.permute.xlu0 %1590
        %1592 = vrot.lane.b32.xlu0 %v661, 112
        %v1593 = vpop.permute.xlu0 %1592
        %1594 = vrot.lane.b32.xlu0 %v666, 112
        %v1595 = vpop.permute.xlu0 %1594
        %1596 = vrot.lane.b32.xlu0 %v671, 112
        %v1597 = vpop.permute.xlu0 %1596
        %1598 = vrot.lane.b32.xlu0 %v676, 112
        %v1599 = vpop.permute.xlu0 %1598
        %1600 = vrot.lane.b32.xlu0 %v681, 112
        %v1601 = vpop.permute.xlu0 %1600
        %1602 = vrot.lane.b32.xlu0 %v686, 112
        %v1603 = vpop.permute.xlu0 %1602
        %1604 = vrot.lane.b32.xlu0 %v691, 112
        %v1605 = vpop.permute.xlu0 %1604
        %1606 = vrot.lane.b32.xlu0 %v696, 112
        %v1607 = vpop.permute.xlu0 %1606
        %1608 = vrot.lane.b32.xlu0 %v701, 112
        %v1609 = vpop.permute.xlu0 %1608
        %1610 = vrot.lane.b32.xlu0 %v706, 112
        %v1611 = vpop.permute.xlu0 %1610
        %1612 = vrot.lane.b32.xlu0 %v711, 112
        %v1613 = vpop.permute.xlu0 %1612
        %1614 = vrot.lane.b32.xlu0 %v716, 112
        %v1615 = vpop.permute.xlu0 %1614
        %1616 = vrot.lane.b32.xlu0 %v721, 112
        %v1617 = vpop.permute.xlu0 %1616
        %1618 = vrot.lane.b32.xlu0 %v726, 112
        %v1619 = vpop.permute.xlu0 %1618
        %v1620 = vsel %vm893, %v1585, 0
        %v1622 = vsel %vm893, %v1587, 0
        %v1624 = vsel %vm893, %v1589, 0
        %v1626 = vsel %vm893, %v1591, 0
        %v1628 = vsel %vm893, %v1593, 0
        %v1630 = vsel %vm893, %v1595, 0
        %v1632 = vsel %vm893, %v1597, 0
        %v1634 = vsel %vm893, %v1599, 0
        %v1636 = vsel %vm893, %v1601, 0
        %v1638 = vsel %vm893, %v1603, 0
        %v1640 = vsel %vm893, %v1605, 0
        %v1642 = vsel %vm893, %v1607, 0
        %v1644 = vsel %vm893, %v1609, 0
        %v1646 = vsel %vm893, %v1611, 0
        %v1648 = vsel %vm893, %v1613, 0
        %v1650 = vsel %vm893, %v1615, 0
        %v1652 = vsel %vm893, %v1617, 0
        %v1654 = vsel %vm893, %v1619, 0
        %1656 = vmatprep.subr.mxu0 0.0
        %1657 = vmatpush1.xpose.msra.mxu0 %v1624
        %1658 = vmatprep.subr.mxu0 0.0
        %1659 = vmatpush1.xpose.msra.mxu0 %v1626
        %1660 = vmatprep.subr.mxu0 0.0
        %1661 = vmatpush1.xpose.msra.mxu0 %v1628
        %1662 = vmatprep.subr.mxu0 0.0
        %1663 = vmatpush1.xpose.msra.mxu0 %v1630
        %1664 = vmatprep.subr.mxu0 0.0
        %1665 = vmatpush1.xpose.msra.mxu0 %v1632
        %1666 = vmatprep.subr.mxu0 0.0
        %1667 = vmatpush1.xpose.msra.mxu0 %v1634
        %1668 = vmatprep.subr.mxu0 0.0
        %1669 = vmatpush1.xpose.msra.mxu0 %v1636
        %1670 = vmatprep.subr.mxu0 0.0
        %1671 = vmatpush1.xpose.msra.mxu0 %v1638
        %1672 = vmatprep.subr.mxu0 0.0
        %1673 = vmatpush1.xpose.msra.mxu0 %v1640
        %1674 = vmatprep.subr.mxu0 0.0
        %1675 = vmatpush1.xpose.msra.mxu0 %v1642
        %1676 = vmatprep.subr.mxu0 0.0
        %1677 = vmatpush1.xpose.msra.mxu0 %v1644
        %1678 = vmatprep.subr.mxu0 0.0
        %1679 = vmatpush1.xpose.msra.mxu0 %v1646
        %1680 = vmatprep.subr.mxu0 0.0
        %1681 = vmatpush1.xpose.msra.mxu0 %v1648
        %1682 = vmatprep.subr.mxu0 0.0
        %1683 = vmatpush1.xpose.msra.mxu0 %v1650
        %1684 = vmatprep.subr.mxu0 0.0
        %1685 = vmatpush1.xpose.msra.mxu0 %v1652
        %1686 = vmatprep.subr.mxu0 0.0
        %1687 = vmatpush1.xpose.msra.mxu0 %v1654
        %1688 = vmatprep.subr.mxu0 0.0
        %1689 = vmatpush1.xpose.msra.mxu0 0.0
        %1690 = vmatprep.subr.mxu0 0.0
        %1691 = vmatpush1.xpose.msra.mxu0 0.0
        %1692 = vmatprep.subr.mxu0 0.0
        %1693 = vmatpush1.xpose.msra.mxu0 0.0
        %1694 = vmatprep.subr.mxu0 0.0
        %1695 = vmatpush1.xpose.msra.mxu0 0.0
        %1696 = vmatprep.subr.mxu0 0.0
        %1697 = vmatpush1.xpose.msra.mxu0 0.0
        %1698 = vmatprep.subr.mxu0 0.0
        %1699 = vmatpush1.xpose.msra.mxu0 0.0
        %1700 = vmatprep.subr.mxu0 0.0
        %1701 = vmatpush1.xpose.msra.mxu0 0.0
        %1702 = vmatprep.subr.mxu0 0.0
        %1703 = vmatpush1.xpose.msra.mxu0 0.0
        %1704 = vmatprep.subr.mxu0 0.0
        %1705 = vmatpush1.xpose.msra.mxu0 0.0
        %1706 = vmatprep.subr.mxu0 0.0
        %1707 = vmatpush1.xpose.msra.mxu0 0.0
        %1708 = vmatprep.subr.mxu0 0.0
        %1709 = vmatpush1.xpose.msra.mxu0 0.0
        %1710 = vmatprep.subr.mxu0 0.0
        %1711 = vmatpush1.xpose.msra.mxu0 0.0
        %1712 = vmatprep.subr.mxu0 0.0
        %1713 = vmatpush1.xpose.msra.mxu0 0.0
        %1714 = vmatprep.subr.mxu0 0.0
        %1715 = vmatpush1.xpose.msra.mxu0 0.0
        %1716 = vmatprep.subr.mxu0 0.0
        %1717 = vmatpush1.xpose.msra.mxu0 0.0
        %1718 = vmatprep.subr.mxu0 0.0
        %1719 = vmatpush1.xpose.msra.mxu0 0.0
        %1720 = vmatprep.mubr.f32.mxu0 0.0
        %1721 = vmatmul.mubr.f32.gmra.mrb[0].mxu0 %v1620
        %v1722 = vpop.f32.mrb[0].mxu0
        %v1723 = vadd.f32 %v892, %v1722
        %v1724 = vpop.f32.mrb[0].mxu0
        %1725 = vmatprep.mubr.f32.mxu0 0.0
        %1726 = vmatmul.mubr.f32.gmra.mrb[0].mxu0 %v1622
        %v1727 = vpop.f32.mrb[0].mxu0
        %v1728 = vadd.f32 %v892, %v1727
        %v1729 = vpop.f32.mrb[0].mxu0
        %1730 = vdwg.mxu0
        %1731 = vmax.xlane.f32.xlu0 %v1723
        %v1732 = vpop.xlane.xlu0 %1731
        %1733 = vmax.xlane.f32.xlu0 %v1728
        %v1734 = vpop.xlane.xlu0 %1733
        %v1735 = vsub.f32 %v1723, %v1732
        %v1736 = vsub.f32 %v1728, %v1734
        %v1737 = vmul.f32 %v1735, 1.442695
        %v1738 = vpow.pop %v1737
        %v1739 = vmul.f32 %v1736, 1.442695
        %v1740 = vpow.pop %v1739
        %1741 = vadd.xlane.f32.xlu0 %v1738
        %v1742 = vpop.xlane.xlu0 %1741
        %1743 = vadd.xlane.f32.xlu0 %v1740
        %v1744 = vpop.xlane.xlu0 %1743
        %v1745 = vrcp.pop %v1742
        %v1746 = vrcp.pop %v1744
        %1747 = vrot.lane.b32.xlu0 %v811, 112
        %v1748 = vpop.permute.xlu0 %1747
        %1749 = vrot.lane.b32.xlu0 %v816, 112
        %v1750 = vpop.permute.xlu0 %1749
        %1751 = vrot.lane.b32.xlu0 %v821, 112
        %v1752 = vpop.permute.xlu0 %1751
        %1753 = vrot.lane.b32.xlu0 %v826, 112
        %v1754 = vpop.permute.xlu0 %1753
        %1755 = vrot.lane.b32.xlu0 %v831, 112
        %v1756 = vpop.permute.xlu0 %1755
        %1757 = vrot.lane.b32.xlu0 %v836, 112
        %v1758 = vpop.permute.xlu0 %1757
        %1759 = vrot.lane.b32.xlu0 %v841, 112
        %v1760 = vpop.permute.xlu0 %1759
        %1761 = vrot.lane.b32.xlu0 %v846, 112
        %v1762 = vpop.permute.xlu0 %1761
        %1763 = vrot.lane.b32.xlu0 %v851, 112
        %v1764 = vpop.permute.xlu0 %1763
        %1765 = vrot.lane.b32.xlu0 %v856, 112
        %v1766 = vpop.permute.xlu0 %1765
        %1767 = vrot.lane.b32.xlu0 %v861, 112
        %v1768 = vpop.permute.xlu0 %1767
        %1769 = vrot.lane.b32.xlu0 %v866, 112
        %v1770 = vpop.permute.xlu0 %1769
        %1771 = vrot.lane.b32.xlu0 %v871, 112
        %v1772 = vpop.permute.xlu0 %1771
        %1773 = vrot.lane.b32.xlu0 %v876, 112
        %v1774 = vpop.permute.xlu0 %1773
        %1775 = vrot.lane.b32.xlu0 %v881, 112
        %v1776 = vpop.permute.xlu0 %1775
        %1777 = vrot.lane.b32.xlu0 %v886, 112
        %v1778 = vpop.permute.xlu0 %1777
        %1795 = vmatprep.subr.mxu0 0.0
        %1796 = vmatpush1.msra.mxu0 %v1748
        %1797 = vmatprep.subr.mxu0 0.0
        %1798 = vmatpush1.msra.mxu0 %v1750
        %1799 = vmatprep.subr.mxu0 0.0
        %1800 = vmatpush1.msra.mxu0 %v1752
        %1801 = vmatprep.subr.mxu0 0.0
        %1802 = vmatpush1.msra.mxu0 %v1754
        %1803 = vmatprep.subr.mxu0 0.0
        %1804 = vmatpush1.msra.mxu0 %v1756
        %1805 = vmatprep.subr.mxu0 0.0
        %1806 = vmatpush1.msra.mxu0 %v1758
        %1807 = vmatprep.subr.mxu0 0.0
        %1808 = vmatpush1.msra.mxu0 %v1760
        %1809 = vmatprep.subr.mxu0 0.0
        %1810 = vmatpush1.msra.mxu0 %v1762
        %1811 = vmatprep.subr.mxu0 0.0
        %1812 = vmatpush1.msra.mxu0 %v1764
        %1813 = vmatprep.subr.mxu0 0.0
        %1814 = vmatpush1.msra.mxu0 %v1766
        %1815 = vmatprep.subr.mxu0 0.0
        %1816 = vmatpush1.msra.mxu0 %v1768
        %1817 = vmatprep.subr.mxu0 0.0
        %1818 = vmatpush1.msra.mxu0 %v1770
        %1819 = vmatprep.subr.mxu0 0.0
        %1820 = vmatpush1.msra.mxu0 %v1772
        %1821 = vmatprep.subr.mxu0 0.0
        %1822 = vmatpush1.msra.mxu0 %v1774
        %1823 = vmatprep.subr.mxu0 0.0
        %1824 = vmatpush1.msra.mxu0 %v1776
        %1825 = vmatprep.subr.mxu0 0.0
        %1826 = vmatpush1.msra.mxu0 %v1778
        %1827 = vmatprep.subr.mxu0 0.0
        %1828 = vmatpush1.msra.mxu0 0.0
        %1829 = vmatprep.subr.mxu0 0.0
        %1830 = vmatpush1.msra.mxu0 0.0
        %1831 = vmatprep.subr.mxu0 0.0
        %1832 = vmatpush1.msra.mxu0 0.0
        %1833 = vmatprep.subr.mxu0 0.0
        %1834 = vmatpush1.msra.mxu0 0.0
        %1835 = vmatprep.subr.mxu0 0.0
        %1836 = vmatpush1.msra.mxu0 0.0
        %1837 = vmatprep.subr.mxu0 0.0
        %1838 = vmatpush1.msra.mxu0 0.0
        %1839 = vmatprep.subr.mxu0 0.0
        %1840 = vmatpush1.msra.mxu0 0.0
        %1841 = vmatprep.subr.mxu0 0.0
        %1842 = vmatpush1.msra.mxu0 0.0
        %1843 = vmatprep.subr.mxu0 0.0
        %1844 = vmatpush1.msra.mxu0 0.0
        %1845 = vmatprep.subr.mxu0 0.0
        %1846 = vmatpush1.msra.mxu0 0.0
        %1847 = vmatprep.subr.mxu0 0.0
        %1848 = vmatpush1.msra.mxu0 0.0
        %1849 = vmatprep.subr.mxu0 0.0
        %1850 = vmatpush1.msra.mxu0 0.0
        %1851 = vmatprep.subr.mxu0 0.0
        %1852 = vmatpush1.msra.mxu0 0.0
        %1853 = vmatprep.subr.mxu0 0.0
        %1854 = vmatpush1.msra.mxu0 0.0
        %1855 = vmatprep.subr.mxu0 0.0
        %1856 = vmatpush1.msra.mxu0 0.0
        %1857 = vmatprep.subr.mxu0 0.0
        %1858 = vmatpush1.msra.mxu0 0.0
        %1859 = vmatprep.mubr.f32.mxu0 0.0
        %1860 = vmatmul.mubr.f32.gmra.mrb[0].mxu0 %v1738
        %v1861 = vpop.f32.mrb[0].mxu0
        %v1862 = vadd.f32 0.0, %v1861
        %v1863 = vpop.f32.mrb[0].mxu0
        %1864 = vmatprep.mubr.f32.mxu0 0.0
        %1865 = vmatmul.mubr.f32.gmra.mrb[0].mxu0 %v1740
        %v1866 = vpop.f32.mrb[0].mxu0
        %v1867 = vadd.f32 0.0, %v1866
        %v1868 = vpop.f32.mrb[0].mxu0
        %1869 = vdwg.mxu0
        %v1870 = vmul.f32 %v1862, %v1745
        %v1871 = vmul.f32 %v1867, %v1746
        %v1872 = vld [vmem:[%s8 + $0x10] sm:$0xff]
        %v1874 = vsel %vm893, %v1870, 0
        %v1877 = vsel %vm893, %v1871, 0
        %1879 = vmatprep.subr.mxu0 0.0
        %1880 = vmatpush1.msra.mxu0 %v1872
        %1881 = vmatprep.subr.mxu0 0.0
        %1882 = vmatpush1.msra.mxu0 0.0
        %1883 = vmatprep.subr.mxu0 0.0
        %1884 = vmatpush1.msra.mxu0 0.0
        %1885 = vmatprep.subr.mxu0 0.0
        %1886 = vmatpush1.msra.mxu0 0.0
        %1887 = vmatprep.subr.mxu0 0.0
        %1888 = vmatpush1.msra.mxu0 0.0
        %1889 = vmatprep.subr.mxu0 0.0
        %1890 = vmatpush1.msra.mxu0 0.0
        %1891 = vmatprep.subr.mxu0 0.0
        %1892 = vmatpush1.msra.mxu0 0.0
        %1893 = vmatprep.subr.mxu0 0.0
        %1894 = vmatpush1.msra.mxu0 0.0
        %1895 = vmatprep.subr.mxu0 0.0
        %1896 = vmatpush1.msra.mxu0 0.0
        %1897 = vmatprep.subr.mxu0 0.0
        %1898 = vmatpush1.msra.mxu0 0.0
        %1899 = vmatprep.subr.mxu0 0.0
        %1900 = vmatpush1.msra.mxu0 0.0
        %1901 = vmatprep.subr.mxu0 0.0
        %1902 = vmatpush1.msra.mxu0 0.0
        %1903 = vmatprep.subr.mxu0 0.0
        %1904 = vmatpush1.msra.mxu0 0.0
        %1905 = vmatprep.subr.mxu0 0.0
        %1906 = vmatpush1.msra.mxu0 0.0
        %1907 = vmatprep.subr.mxu0 0.0
        %1908 = vmatpush1.msra.mxu0 0.0
        %1909 = vmatprep.subr.mxu0 0.0
        %1910 = vmatpush1.msra.mxu0 0.0
        %1911 = vmatprep.subr.mxu0 0.0
        %1912 = vmatpush1.msra.mxu0 0.0
        %1913 = vmatprep.subr.mxu0 0.0
        %1914 = vmatpush1.msra.mxu0 0.0
        %1915 = vmatprep.subr.mxu0 0.0
        %1916 = vmatpush1.msra.mxu0 0.0
        %1917 = vmatprep.subr.mxu0 0.0
        %1918 = vmatpush1.msra.mxu0 0.0
        %1919 = vmatprep.subr.mxu0 0.0
        %1920 = vmatpush1.msra.mxu0 0.0
        %1921 = vmatprep.subr.mxu0 0.0
        %1922 = vmatpush1.msra.mxu0 0.0
        %1923 = vmatprep.subr.mxu0 0.0
        %1924 = vmatpush1.msra.mxu0 0.0
        %1925 = vmatprep.subr.mxu0 0.0
        %1926 = vmatpush1.msra.mxu0 0.0
        %1927 = vmatprep.subr.mxu0 0.0
        %1928 = vmatpush1.msra.mxu0 0.0
        %1929 = vmatprep.subr.mxu0 0.0
        %1930 = vmatpush1.msra.mxu0 0.0
        %1931 = vmatprep.subr.mxu0 0.0
        %1932 = vmatpush1.msra.mxu0 0.0
        %1933 = vmatprep.subr.mxu0 0.0
        %1934 = vmatpush1.msra.mxu0 0.0
        %1935 = vmatprep.subr.mxu0 0.0
        %1936 = vmatpush1.msra.mxu0 0.0
        %1937 = vmatprep.subr.mxu0 0.0
        %1938 = vmatpush1.msra.mxu0 0.0
        %1939 = vmatprep.subr.mxu0 0.0
        %1940 = vmatpush1.msra.mxu0 0.0
        %1941 = vmatprep.subr.mxu0 0.0
        %1942 = vmatpush1.msra.mxu0 0.0
        %1943 = vmatprep.mubr.f32.mxu0 0.0
        %1944 = vmatmul.mubr.f32.gmra.mrb[0].mxu0 %v1874
        %v1945 = vpop.f32.mrb[0].mxu0
        %v1946 = vadd.f32 0.0, %v1945
        %v1947 = vpop.f32.mrb[0].mxu0
        %1948 = vmatprep.mubr.f32.mxu0 0.0
        %1949 = vmatmul.mubr.f32.gmra.mrb[0].mxu0 %v1877
        %v1950 = vpop.f32.mrb[0].mxu0
        %v1951 = vadd.f32 0.0, %v1950
        %v1952 = vpop.f32.mrb[0].mxu0
        %1953 = vdwg.mxu0
        %v1954 = vadd.f32 %v1576, %v1946
        %v1955 = vadd.f32 %v1581, %v1951
        %1956 = vrot.lane.b32.xlu0 %v512, 104
        %v1957 = vpop.permute.xlu0 %1956
        %1958 = vrot.lane.b32.xlu0 %v517, 104
        %v1959 = vpop.permute.xlu0 %1958
        %1960 = vrot.lane.b32.xlu0 %v651, 104
        %v1961 = vpop.permute.xlu0 %1960
        %1962 = vrot.lane.b32.xlu0 %v656, 104
        %v1963 = vpop.permute.xlu0 %1962
        %1964 = vrot.lane.b32.xlu0 %v661, 104
        %v1965 = vpop.permute.xlu0 %1964
        %1966 = vrot.lane.b32.xlu0 %v666, 104
        %v1967 = vpop.permute.xlu0 %1966
        %1968 = vrot.lane.b32.xlu0 %v671, 104
        %v1969 = vpop.permute.xlu0 %1968
        %1970 = vrot.lane.b32.xlu0 %v676, 104
        %v1971 = vpop.permute.xlu0 %1970
        %1972 = vrot.lane.b32.xlu0 %v681, 104
        %v1973 = vpop.permute.xlu0 %1972
        %1974 = vrot.lane.b32.xlu0 %v686, 104
        %v1975 = vpop.permute.xlu0 %1974
        %1976 = vrot.lane.b32.xlu0 %v691, 104
        %v1977 = vpop.permute.xlu0 %1976
        %1978 = vrot.lane.b32.xlu0 %v696, 104
        %v1979 = vpop.permute.xlu0 %1978
        %1980 = vrot.lane.b32.xlu0 %v701, 104
        %v1981 = vpop.permute.xlu0 %1980
        %1982 = vrot.lane.b32.xlu0 %v706, 104
        %v1983 = vpop.permute.xlu0 %1982
        %1984 = vrot.lane.b32.xlu0 %v711, 104
        %v1985 = vpop.permute.xlu0 %1984
        %1986 = vrot.lane.b32.xlu0 %v716, 104
        %v1987 = vpop.permute.xlu0 %1986
        %1988 = vrot.lane.b32.xlu0 %v721, 104
        %v1989 = vpop.permute.xlu0 %1988
        %1990 = vrot.lane.b32.xlu0 %v726, 104
        %v1991 = vpop.permute.xlu0 %1990
        %v1992 = vsel %vm893, %v1957, 0
        %v1994 = vsel %vm893, %v1959, 0
        %v1996 = vsel %vm893, %v1961, 0
        %v1998 = vsel %vm893, %v1963, 0
        %v2000 = vsel %vm893, %v1965, 0
        %v2002 = vsel %vm893, %v1967, 0
        %v2004 = vsel %vm893, %v1969, 0
        %v2006 = vsel %vm893, %v1971, 0
        %v2008 = vsel %vm893, %v1973, 0
        %v2010 = vsel %vm893, %v1975, 0
        %v2012 = vsel %vm893, %v1977, 0
        %v2014 = vsel %vm893, %v1979, 0
        %v2016 = vsel %vm893, %v1981, 0
        %v2018 = vsel %vm893, %v1983, 0
        %v2020 = vsel %vm893, %v1985, 0
        %v2022 = vsel %vm893, %v1987, 0
        %v2024 = vsel %vm893, %v1989, 0
        %v2026 = vsel %vm893, %v1991, 0
        %2028 = vmatprep.subr.mxu0 0.0
        %2029 = vmatpush1.xpose.msra.mxu0 %v1996
        %2030 = vmatprep.subr.mxu0 0.0
        %2031 = vmatpush1.xpose.msra.mxu0 %v1998
        %2032 = vmatprep.subr.mxu0 0.0
        %2033 = vmatpush1.xpose.msra.mxu0 %v2000
        %2034 = vmatprep.subr.mxu0 0.0
        %2035 = vmatpush1.xpose.msra.mxu0 %v2002
        %2036 = vmatprep.subr.mxu0 0.0
        %2037 = vmatpush1.xpose.msra.mxu0 %v2004
        %2038 = vmatprep.subr.mxu0 0.0
        %2039 = vmatpush1.xpose.msra.mxu0 %v2006
        %2040 = vmatprep.subr.mxu0 0.0
        %2041 = vmatpush1.xpose.msra.mxu0 %v2008
        %2042 = vmatprep.subr.mxu0 0.0
        %2043 = vmatpush1.xpose.msra.mxu0 %v2010
        %2044 = vmatprep.subr.mxu0 0.0
        %2045 = vmatpush1.xpose.msra.mxu0 %v2012
        %2046 = vmatprep.subr.mxu0 0.0
        %2047 = vmatpush1.xpose.msra.mxu0 %v2014
        %2048 = vmatprep.subr.mxu0 0.0
        %2049 = vmatpush1.xpose.msra.mxu0 %v2016
        %2050 = vmatprep.subr.mxu0 0.0
        %2051 = vmatpush1.xpose.msra.mxu0 %v2018
        %2052 = vmatprep.subr.mxu0 0.0
        %2053 = vmatpush1.xpose.msra.mxu0 %v2020
        %2054 = vmatprep.subr.mxu0 0.0
        %2055 = vmatpush1.xpose.msra.mxu0 %v2022
        %2056 = vmatprep.subr.mxu0 0.0
        %2057 = vmatpush1.xpose.msra.mxu0 %v2024
        %2058 = vmatprep.subr.mxu0 0.0
        %2059 = vmatpush1.xpose.msra.mxu0 %v2026
        %2060 = vmatprep.subr.mxu0 0.0
        %2061 = vmatpush1.xpose.msra.mxu0 0.0
        %2062 = vmatprep.subr.mxu0 0.0
        %2063 = vmatpush1.xpose.msra.mxu0 0.0
        %2064 = vmatprep.subr.mxu0 0.0
        %2065 = vmatpush1.xpose.msra.mxu0 0.0
        %2066 = vmatprep.subr.mxu0 0.0
        %2067 = vmatpush1.xpose.msra.mxu0 0.0
        %2068 = vmatprep.subr.mxu0 0.0
        %2069 = vmatpush1.xpose.msra.mxu0 0.0
        %2070 = vmatprep.subr.mxu0 0.0
        %2071 = vmatpush1.xpose.msra.mxu0 0.0
        %2072 = vmatprep.subr.mxu0 0.0
        %2073 = vmatpush1.xpose.msra.mxu0 0.0
        %2074 = vmatprep.subr.mxu0 0.0
        %2075 = vmatpush1.xpose.msra.mxu0 0.0
        %2076 = vmatprep.subr.mxu0 0.0
        %2077 = vmatpush1.xpose.msra.mxu0 0.0
        %2078 = vmatprep.subr.mxu0 0.0
        %2079 = vmatpush1.xpose.msra.mxu0 0.0
        %2080 = vmatprep.subr.mxu0 0.0
        %2081 = vmatpush1.xpose.msra.mxu0 0.0
        %2082 = vmatprep.subr.mxu0 0.0
        %2083 = vmatpush1.xpose.msra.mxu0 0.0
        %2084 = vmatprep.subr.mxu0 0.0
        %2085 = vmatpush1.xpose.msra.mxu0 0.0
        %2086 = vmatprep.subr.mxu0 0.0
        %2087 = vmatpush1.xpose.msra.mxu0 0.0
        %2088 = vmatprep.subr.mxu0 0.0
        %2089 = vmatpush1.xpose.msra.mxu0 0.0
        %2090 = vmatprep.subr.mxu0 0.0
        %2091 = vmatpush1.xpose.msra.mxu0 0.0
        %2092 = vmatprep.mubr.f32.mxu0 0.0
        %2093 = vmatmul.mubr.f32.gmra.mrb[0].mxu0 %v1992
        %v2094 = vpop.f32.mrb[0].mxu0
        %v2095 = vadd.f32 %v892, %v2094
        %v2096 = vpop.f32.mrb[0].mxu0
        %2097 = vmatprep.mubr.f32.mxu0 0.0
        %2098 = vmatmul.mubr.f32.gmra.mrb[0].mxu0 %v1994
        %v2099 = vpop.f32.mrb[0].mxu0
        %v2100 = vadd.f32 %v892, %v2099
        %v2101 = vpop.f32.mrb[0].mxu0
        %2102 = vdwg.mxu0
        %2103 = vmax.xlane.f32.xlu0 %v2095
        %v2104 = vpop.xlane.xlu0 %2103
        %2105 = vmax.xlane.f32.xlu0 %v2100
        %v2106 = vpop.xlane.xlu0 %2105
        %v2107 = vsub.f32 %v2095, %v2104
        %v2108 = vsub.f32 %v2100, %v2106
        %v2109 = vmul.f32 %v2107, 1.442695
        %v2110 = vpow.pop %v2109
        %v2111 = vmul.f32 %v2108, 1.442695
        %v2112 = vpow.pop %v2111
        %2113 = vadd.xlane.f32.xlu0 %v2110
        %v2114 = vpop.xlane.xlu0 %2113
        %2115 = vadd.xlane.f32.xlu0 %v2112
        %v2116 = vpop.xlane.xlu0 %2115
        %v2117 = vrcp.pop %v2114
        %v2118 = vrcp.pop %v2116
        %2119 = vrot.lane.b32.xlu0 %v811, 104
        %v2120 = vpop.permute.xlu0 %2119
        %2121 = vrot.lane.b32.xlu0 %v816, 104
        %v2122 = vpop.permute.xlu0 %2121
        %2123 = vrot.lane.b32.xlu0 %v821, 104
        %v2124 = vpop.permute.xlu0 %2123
        %2125 = vrot.lane.b32.xlu0 %v826, 104
        %v2126 = vpop.permute.xlu0 %2125
        %2127 = vrot.lane.b32.xlu0 %v831, 104
        %v2128 = vpop.permute.xlu0 %2127
        %2129 = vrot.lane.b32.xlu0 %v836, 104
        %v2130 = vpop.permute.xlu0 %2129
        %2131 = vrot.lane.b32.xlu0 %v841, 104
        %v2132 = vpop.permute.xlu0 %2131
        %2133 = vrot.lane.b32.xlu0 %v846, 104
        %v2134 = vpop.permute.xlu0 %2133
        %2135 = vrot.lane.b32.xlu0 %v851, 104
        %v2136 = vpop.permute.xlu0 %2135
        %2137 = vrot.lane.b32.xlu0 %v856, 104
        %v2138 = vpop.permute.xlu0 %2137
        %2139 = vrot.lane.b32.xlu0 %v861, 104
        %v2140 = vpop.permute.xlu0 %2139
        %2141 = vrot.lane.b32.xlu0 %v866, 104
        %v2142 = vpop.permute.xlu0 %2141
        %2143 = vrot.lane.b32.xlu0 %v871, 104
        %v2144 = vpop.permute.xlu0 %2143
        %2145 = vrot.lane.b32.xlu0 %v876, 104
        %v2146 = vpop.permute.xlu0 %2145
        %2147 = vrot.lane.b32.xlu0 %v881, 104
        %v2148 = vpop.permute.xlu0 %2147
        %2149 = vrot.lane.b32.xlu0 %v886, 104
        %v2150 = vpop.permute.xlu0 %2149
        %2167 = vmatprep.subr.mxu0 0.0
        %2168 = vmatpush1.msra.mxu0 %v2120
        %2169 = vmatprep.subr.mxu0 0.0
        %2170 = vmatpush1.msra.mxu0 %v2122
        %2171 = vmatprep.subr.mxu0 0.0
        %2172 = vmatpush1.msra.mxu0 %v2124
        %2173 = vmatprep.subr.mxu0 0.0
        %2174 = vmatpush1.msra.mxu0 %v2126
        %2175 = vmatprep.subr.mxu0 0.0
        %2176 = vmatpush1.msra.mxu0 %v2128
        %2177 = vmatprep.subr.mxu0 0.0
        %2178 = vmatpush1.msra.mxu0 %v2130
        %2179 = vmatprep.subr.mxu0 0.0
        %2180 = vmatpush1.msra.mxu0 %v2132
        %2181 = vmatprep.subr.mxu0 0.0
        %2182 = vmatpush1.msra.mxu0 %v2134
        %2183 = vmatprep.subr.mxu0 0.0
        %2184 = vmatpush1.msra.mxu0 %v2136
        %2185 = vmatprep.subr.mxu0 0.0
        %2186 = vmatpush1.msra.mxu0 %v2138
        %2187 = vmatprep.subr.mxu0 0.0
        %2188 = vmatpush1.msra.mxu0 %v2140
        %2189 = vmatprep.subr.mxu0 0.0
        %2190 = vmatpush1.msra.mxu0 %v2142
        %2191 = vmatprep.subr.mxu0 0.0
        %2192 = vmatpush1.msra.mxu0 %v2144
        %2193 = vmatprep.subr.mxu0 0.0
        %2194 = vmatpush1.msra.mxu0 %v2146
        %2195 = vmatprep.subr.mxu0 0.0
        %2196 = vmatpush1.msra.mxu0 %v2148
        %2197 = vmatprep.subr.mxu0 0.0
        %2198 = vmatpush1.msra.mxu0 %v2150
        %2199 = vmatprep.subr.mxu0 0.0
        %2200 = vmatpush1.msra.mxu0 0.0
        %2201 = vmatprep.subr.mxu0 0.0
        %2202 = vmatpush1.msra.mxu0 0.0
        %2203 = vmatprep.subr.mxu0 0.0
        %2204 = vmatpush1.msra.mxu0 0.0
        %2205 = vmatprep.subr.mxu0 0.0
        %2206 = vmatpush1.msra.mxu0 0.0
        %2207 = vmatprep.subr.mxu0 0.0
        %2208 = vmatpush1.msra.mxu0 0.0
        %2209 = vmatprep.subr.mxu0 0.0
        %2210 = vmatpush1.msra.mxu0 0.0
        %2211 = vmatprep.subr.mxu0 0.0
        %2212 = vmatpush1.msra.mxu0 0.0
        %2213 = vmatprep.subr.mxu0 0.0
        %2214 = vmatpush1.msra.mxu0 0.0
        %2215 = vmatprep.subr.mxu0 0.0
        %2216 = vmatpush1.msra.mxu0 0.0
        %2217 = vmatprep.subr.mxu0 0.0
        %2218 = vmatpush1.msra.mxu0 0.0
        %2219 = vmatprep.subr.mxu0 0.0
        %2220 = vmatpush1.msra.mxu0 0.0
        %2221 = vmatprep.subr.mxu0 0.0
        %2222 = vmatpush1.msra.mxu0 0.0
        %2223 = vmatprep.subr.mxu0 0.0
        %2224 = vmatpush1.msra.mxu0 0.0
        %2225 = vmatprep.subr.mxu0 0.0
        %2226 = vmatpush1.msra.mxu0 0.0
        %2227 = vmatprep.subr.mxu0 0.0
        %2228 = vmatpush1.msra.mxu0 0.0
        %2229 = vmatprep.subr.mxu0 0.0
        %2230 = vmatpush1.msra.mxu0 0.0
        %2231 = vmatprep.mubr.f32.mxu0 0.0
        %2232 = vmatmul.mubr.f32.gmra.mrb[0].mxu0 %v2110
        %v2233 = vpop.f32.mrb[0].mxu0
        %v2234 = vadd.f32 0.0, %v2233
        %v2235 = vpop.f32.mrb[0].mxu0
        %2236 = vmatprep.mubr.f32.mxu0 0.0
        %2237 = vmatmul.mubr.f32.gmra.mrb[0].mxu0 %v2112
        %v2238 = vpop.f32.mrb[0].mxu0
        %v2239 = vadd.f32 0.0, %v2238
        %v2240 = vpop.f32.mrb[0].mxu0
        %2241 = vdwg.mxu0
        %v2242 = vmul.f32 %v2234, %v2117
        %v2243 = vmul.f32 %v2239, %v2118
        %v2244 = vld [vmem:[%s8 + $0x18] sm:$0xff]
        %v2246 = vsel %vm893, %v2242, 0
        %v2249 = vsel %vm893, %v2243, 0
        %2251 = vmatprep.subr.mxu0 0.0
        %2252 = vmatpush1.msra.mxu0 %v2244
        %2253 = vmatprep.subr.mxu0 0.0
        %2254 = vmatpush1.msra.mxu0 0.0
        %2255 = vmatprep.subr.mxu0 0.0
        %2256 = vmatpush1.msra.mxu0 0.0
        %2257 = vmatprep.subr.mxu0 0.0
        %2258 = vmatpush1.msra.mxu0 0.0
        %2259 = vmatprep.subr.mxu0 0.0
        %2260 = vmatpush1.msra.mxu0 0.0
        %2261 = vmatprep.subr.mxu0 0.0
        %2262 = vmatpush1.msra.mxu0 0.0
        %2263 = vmatprep.subr.mxu0 0.0
        %2264 = vmatpush1.msra.mxu0 0.0
        %2265 = vmatprep.subr.mxu0 0.0
        %2266 = vmatpush1.msra.mxu0 0.0
        %2267 = vmatprep.subr.mxu0 0.0
        %2268 = vmatpush1.msra.mxu0 0.0
        %2269 = vmatprep.subr.mxu0 0.0
        %2270 = vmatpush1.msra.mxu0 0.0
        %2271 = vmatprep.subr.mxu0 0.0
        %2272 = vmatpush1.msra.mxu0 0.0
        %2273 = vmatprep.subr.mxu0 0.0
        %2274 = vmatpush1.msra.mxu0 0.0
        %2275 = vmatprep.subr.mxu0 0.0
        %2276 = vmatpush1.msra.mxu0 0.0
        %2277 = vmatprep.subr.mxu0 0.0
        %2278 = vmatpush1.msra.mxu0 0.0
        %2279 = vmatprep.subr.mxu0 0.0
        %2280 = vmatpush1.msra.mxu0 0.0
        %2281 = vmatprep.subr.mxu0 0.0
        %2282 = vmatpush1.msra.mxu0 0.0
        %2283 = vmatprep.subr.mxu0 0.0
        %2284 = vmatpush1.msra.mxu0 0.0
        %2285 = vmatprep.subr.mxu0 0.0
        %2286 = vmatpush1.msra.mxu0 0.0
        %2287 = vmatprep.subr.mxu0 0.0
        %2288 = vmatpush1.msra.mxu0 0.0
        %2289 = vmatprep.subr.mxu0 0.0
        %2290 = vmatpush1.msra.mxu0 0.0
        %2291 = vmatprep.subr.mxu0 0.0
        %2292 = vmatpush1.msra.mxu0 0.0
        %2293 = vmatprep.subr.mxu0 0.0
        %2294 = vmatpush1.msra.mxu0 0.0
        %2295 = vmatprep.subr.mxu0 0.0
        %2296 = vmatpush1.msra.mxu0 0.0
        %2297 = vmatprep.subr.mxu0 0.0
        %2298 = vmatpush1.msra.mxu0 0.0
        %2299 = vmatprep.subr.mxu0 0.0
        %2300 = vmatpush1.msra.mxu0 0.0
        %2301 = vmatprep.subr.mxu0 0.0
        %2302 = vmatpush1.msra.mxu0 0.0
        %2303 = vmatprep.subr.mxu0 0.0
        %2304 = vmatpush1.msra.mxu0 0.0
        %2305 = vmatprep.subr.mxu0 0.0
        %2306 = vmatpush1.msra.mxu0 0.0
        %2307 = vmatprep.subr.mxu0 0.0
        %2308 = vmatpush1.msra.mxu0 0.0
        %2309 = vmatprep.subr.mxu0 0.0
        %2310 = vmatpush1.msra.mxu0 0.0
        %2311 = vmatprep.subr.mxu0 0.0
        %2312 = vmatpush1.msra.mxu0 0.0
        %2313 = vmatprep.subr.mxu0 0.0
        %2314 = vmatpush1.msra.mxu0 0.0
        %2315 = vmatprep.mubr.f32.mxu0 0.0
        %2316 = vmatmul.mubr.f32.gmra.mrb[0].mxu0 %v2246
        %v2317 = vpop.f32.mrb[0].mxu0
        %v2318 = vadd.f32 0.0, %v2317
        %v2319 = vpop.f32.mrb[0].mxu0
        %2320 = vmatprep.mubr.f32.mxu0 0.0
        %2321 = vmatmul.mubr.f32.gmra.mrb[0].mxu0 %v2249
        %v2322 = vpop.f32.mrb[0].mxu0
        %v2323 = vadd.f32 0.0, %v2322
        %v2324 = vpop.f32.mrb[0].mxu0
        %2325 = vdwg.mxu0
        %v2326 = vadd.f32 %v1954, %v2318
        %v2327 = vadd.f32 %v1955, %v2323
        %v2328 = vld [vmem:[%s9] sm:$0x1]
        %v2330 = vlaneseq
        %v2331 = vshrl.u32 %v2330, 7
        %v2332 = vsub.s32 0, %v2331
        %v2333 = vrot.slane %v2328, %v2332
        %v2335 = vadd.f32 %v2326, %v2333
        %v2336 = vadd.f32 %v2327, %v2333
        %2337 = vst.msk [vmem:[%s392] sm:$0xff] %vm438, %v2335
        %2338 = vst.msk [vmem:[%s392 + $0x8] sm:$0xff] %vm438, %v2336
        %s2339 = sand.u32 %s268, 1
        %s2340 = scalar_lea.sflag [#allocation3], %s2339
        %s2341 = sand.u32 %s268, 1
        %s2342 = smul.addr %s2341, 16
        %s2343 = scalar_lea.vmem [#allocation2], %s2342
        // Predicated region
        $region61: #{tpu_custom_call.1} parent=59 // pred_check
          %p2344 = pneg %p278
        $region62: #{tpu_custom_call.1} parent=59 // pred_check_branch
          %2346 = sbr.rel (%p2344) target = $region64
        $region63: #{tpu_custom_call.1} parent=59 // pred_region
          %s2347 = smul.u32 2, %s29
          %s2349 = ssub.s32 256, 256
          %2350 = vsyncadd %s2340, %s2349
          %s2351 = smul.addr %s28, 2
          %s2352 = sadd.s32 %s2347, %s2351
          %s2353 = smul.addr %s2352, 128
          %s2354 = scalar_lea.hbm %s10, %s2353
          %s2355 = sshll.u32 %s2343, 4
          %s2356 = int_to_ptr.vmem [resolvable:$true] %s2355
          %2361 = dma.vmem_to_hbm [thread:$0]  %s2356, 256, %s2354, %s2340, 128, 128, 8
        $region64: #{tpu_custom_call.1} parent=59 // pred_fallthru
          _
      $region60: #{tpu_custom_call.1} parent=5 // pred_fallthru
        _
      %p2362 = scmp.le.s32.totalorder 2, %s19
      // Predicated region
      $region65: #{tpu_custom_call.1} parent=5 // pred_check
        %p2363 = pneg %p2362
      $region66: #{tpu_custom_call.1} parent=5 // pred_check_branch
        %2365 = sbr.rel (%p2363) target = $region68
      $region67: #{tpu_custom_call.1} parent=5 // pred_region
        %s2366 = ssub.s32 %s19, 2
        // Predicated region
        $region69: #{tpu_custom_call.1} parent=67 // pred_check
          %p2367 = pneg %p284
        $region70: #{tpu_custom_call.1} parent=67 // pred_check_branch
          %2369 = sbr.rel (%p2367) target = $region72
        $region71: #{tpu_custom_call.1} parent=67 // pred_region
          %s2370 = sand.u32 %s269, 1
          %s2371 = scalar_lea.sflag [#allocation3], %s2370
          %s2372 = sand.u32 %s269, 1
          %s2373 = smul.addr %s2372, 16
          %s2374 = scalar_lea.vmem [#allocation2], %s2373
          %2375 = dma.done %s2371, 256
        $region72: #{tpu_custom_call.1} parent=67 // pred_fallthru
          _
      $region68: #{tpu_custom_call.1} parent=5 // pred_fallthru
        _
    $region6: #{tpu_custom_call.1} parent=1 // loop_footer
      %s23 = sadd.s32 1, %s19
    $region7: #{tpu_custom_call.1} parent=1 // loop_footer_branch
      %18 = sbr.rel target = $region3
    $region8: #{tpu_custom_call.1} parent=1 // loop_exit
      _
    %2376 = vsyncpa [#allocation3], 1
    %s2377 = scalar_lea.sflag [#allocation3], 1
    %2378 = vsyncpa %s2377, 1

</llo_original>
